<compile_context>
chip_gen: v5e
topology: v5e:2x2
jax: 0.10.0
libtpu: 0.0.40
codegen_flags: <defaults>
</compile_context>

<pallas_src>
import functools

import jax
import jax.numpy as jnp
from jax import lax
from jax.experimental import pallas as pl
from jax.experimental.pallas import tpu as pltpu

CHN_MID = 32
EPS = 0.1
LRELU_SLOPE = 0.2

NUM_SLICES = 2                 # pixel range split across (up to) two TensorCores
LANES = 128
PIX_ALIGN = 8 * LANES          # tile multiple of 1024 -> dense (8, TP/8) stays lane-aligned
DEFAULT_TILE_PIXELS = 32768    # amortizes ~0.35us/step; ~<20 MiB VMEM -> safe on v7x too
VMEM_LIMIT_BYTES = 48 * 1024 * 1024


def _round_up(x, m):
    return ((x + m - 1) // m) * m


def _bce_ranking_kernel(d0_ref, d1_ref, judge_ref,
                        w1p_ref, w2_ref, b2_ref, w3_ref, b3_ref,
                        out_ref,
                        feats_ref, zd_ref, acc_ref,
                        *, n_valid, n_padded, use_bf16_matmul):
    t = pl.program_id(1)
    tp = d0_ref.shape[1]       # pixels per tile (lane axis)
    tpd = tp // 8              # dense-layout columns

    @pl.when(t == 0)
    def _init():
        acc_ref[...] = jnp.zeros_like(acc_ref)
        # Row 5 is the constant-1 "bias feature"; rows 6..7 pad the operand to 8.
        # Zero them so uninitialized VMEM (possibly NaN bits) can't leak through
        # the zero weight columns.
        feats_ref[5:6, :] = jnp.ones((1, tp), jnp.float32)
        feats_ref[6:8, :] = jnp.zeros((2, tp), jnp.float32)

    d0 = d0_ref[...]           # (1, tp), pixels on lanes
    d1 = d1_ref[...]

    # Feature rows of cat((d0, d1, d0-d1, d0/(d1+eps), d1/(d0+eps)), C).
    # Divides become EUP reciprocals + one VPU multiply each.
    feats_ref[0:1, :] = d0
    feats_ref[1:2, :] = d1
    feats_ref[2:3, :] = d0 - d1
    feats_ref[3:4, :] = d0 * pl.reciprocal(d1 + EPS, approx=False)
    feats_ref[4:5, :] = d1 * pl.reciprocal(d0 + EPS, approx=False)

    feats = feats_ref[...]     # (8, tp)
    w1p = w1p_ref[...]         # (CHN_MID, 8)  conv1 weight, b1 folded into column 5
    w2 = w2_ref[...]           # (CHN_MID, CHN_MID)
    if use_bf16_matmul:
        feats = feats.astype(jnp.bfloat16)
        w1p = w1p.astype(jnp.bfloat16)
        w2 = w2.astype(jnp.bfloat16)

    # conv1 (1x1, 5 -> chn_mid) on the MXU, bias folded via the ones row.
    h1 = jnp.dot(w1p, feats, preferred_element_type=jnp.float32)        # (32, tp)
    h1 = jnp.maximum(h1, LRELU_SLOPE * h1)                              # LeakyReLU(0.2)

    # conv2 (1x1, chn_mid -> chn_mid) on the MXU.
    h1m = h1.astype(jnp.bfloat16) if use_bf16_matmul else h1
    h2 = jnp.dot(w2, h1m, preferred_element_type=jnp.float32) + b2_ref[...]
    h2 = jnp.maximum(h2, LRELU_SLOPE * h2)

    # conv3 (1x1, chn_mid -> 1): multiply + sublane reduce (avoids an N=1 matmul).
    zrow = jnp.sum(w3_ref[...] * h2, axis=0, keepdims=True)             # (1, tp)

    # Relayout z once per tile to a dense (8, tp/8) block so the whole BCE tail
    # runs on fully occupied vregs; judge arrives already densified.
    for i in range(8):
        zd_ref[i:i + 1, :] = zrow[:, i * tpd:(i + 1) * tpd]
    z = zd_ref[...] + b3_ref[0, 0]                                       # (8, tpd)

    per = (judge_ref[...] + 1.0) * 0.5                                   # (8, tpd)
    # Fused sigmoid + BCE in logits form (== torch BCELoss while its -100 log
    # clamp is inactive, i.e. |z| < ~100):
    #   bce = per*softplus(-z) + (1-per)*softplus(z) = softplus(-z) + (1-per)*z
    # (log1p would be marginally more accurate; plain log kept for guaranteed
    #  Mosaic lowering — numerically irrelevant at these magnitudes.)
    softplus_neg_z = jnp.maximum(-z, 0.0) + jnp.log(1.0 + jnp.exp(-jnp.abs(z)))
    bce = softplus_neg_z + (1.0 - per) * z                               # (8, tpd)

    if n_valid == n_padded:
        acc_ref[...] += bce
    else:
        # Only tiles that overlap the padded tail of the flat pixel range pay
        # for the mask; clean tiles take the unmasked branch.
        g = pl.program_id(0) * pl.num_programs(1) + t
        tile_start = g * tp

        @pl.when(tile_start + tp <= n_valid)
        def _no_mask():
            acc_ref[...] += bce

        @pl.when(tile_start + tp > n_valid)
        def _masked():
            row = lax.broadcasted_iota(jnp.int32, bce.shape, 0)
            col = lax.broadcasted_iota(jnp.int32, bce.shape, 1)
            gidx = tile_start + row * tpd + col
            acc_ref[...] += jnp.where(gidx < n_valid, bce, 0.0)

    # Cross-lane/sublane reduce + broadcast store only once per slice.
    @pl.when(t == pl.num_programs(1) - 1)
    def _finalize():
        col_sum = jnp.sum(acc_ref[...], axis=1, keepdims=True)          # (8, 1)
        total = jnp.sum(col_sum, axis=0, keepdims=True)                  # (1, 1)
        out_ref[...] = jnp.zeros_like(out_ref) + total


def bce_ranking_loss(d0, d1, judge, params,
                     tile_pixels=DEFAULT_TILE_PIXELS, use_bf16_matmul=False):
    """d0, d1, judge: NCHW float arrays with C == 1. Returns the scalar BCE loss."""
    n, c, h, w = d0.shape
    assert c == 1 and d1.shape == d0.shape and judge.shape == d0.shape
    p = n * h * w

    w1, b1, w2, b2, w3, b3 = params

    # Tile sizing: multiple of 1024 pixels so (8, tp/8) dense blocks are lane-aligned.
    tp = min(_round_up(tile_pixels, PIX_ALIGN),
             _round_up(-(-p // NUM_SLICES), PIX_ALIGN))
    tp = max(tp, PIX_ALIGN)
    tpd = tp // 8
    tiles_per_slice = -(-p // (NUM_SLICES * tp))
    num_tiles = NUM_SLICES * tiles_per_slice
    p_pad = num_tiles * tp

    def flat_pad(x):
        x = x.reshape(p).astype(jnp.float32)
        if p_pad != p:
            x = jnp.pad(x, (0, p_pad - p))
        return x

    d0_f = flat_pad(d0).reshape(1, p_pad)
    d1_f = flat_pad(d1).reshape(1, p_pad)
    # judge is consumed in the dense (8, tp/8)-per-tile layout (matches gidx math).
    jd_f = flat_pad(judge).reshape(num_tiles * 8, tpd)

    # conv1 weight padded to 8 "features": cols 0-4 = w1, col 5 = b1, cols 6-7 = 0.
    w1p = jnp.zeros((CHN_MID, 8), jnp.float32)
    w1p = w1p.at[:, 0:5].set(w1)
    w1p = w1p.at[:, 5].set(b1[:, 0])

    kernel = functools.partial(_bce_ranking_kernel, n_valid=p, n_padded=p_pad,
                               use_bf16_matmul=use_bf16_matmul)

    data_spec = pl.BlockSpec((1, tp), lambda s, t: (0, s * tiles_per_slice + t))
    judge_spec = pl.BlockSpec((8, tpd), lambda s, t: (s * tiles_per_slice + t, 0))

    def const_spec(shape):
        return pl.BlockSpec(shape, lambda s, t: (0, 0))

    grid_spec = pltpu.PrefetchScalarGridSpec(
        num_scalar_prefetch=0,
        grid=(NUM_SLICES, tiles_per_slice),
        in_specs=[
            data_spec, data_spec, judge_spec,                  # d0, d1, judge(dense)
            const_spec(w1p.shape),                             # conv1 weight (+bias)
            const_spec(w2.shape), const_spec(b2.shape),        # conv2
            const_spec(w3.shape),                              # conv3 weight
            pl.BlockSpec(memory_space=pltpu.MemorySpace.SMEM), # conv3 bias scalar
        ],
        out_specs=pl.BlockSpec((1, LANES), lambda s, t: (0, s)),
        scratch_shapes=[
            pltpu.VMEM((8, tp), jnp.float32),    # feats (MXU operand for conv1)
            pltpu.VMEM((8, tpd), jnp.float32),   # dense relayout of z
            pltpu.VMEM((8, tpd), jnp.float32),   # per-slice bce accumulator
        ],
    )

    cost = pl.CostEstimate(
        flops=int(p) * (2 * (8 * CHN_MID + CHN_MID * CHN_MID + CHN_MID) + 24),
        transcendentals=4 * int(p),
        bytes_accessed=int(3 * p_pad * 4
                           + 4 * (w1p.size + w2.size + b2.size + w3.size + b3.size)
                           + NUM_SLICES * LANES * 4),
    )

    partials = pl.pallas_call(
        kernel,
        out_shape=jax.ShapeDtypeStruct((1, NUM_SLICES * LANES), jnp.float32),
        grid_spec=grid_spec,
        compiler_params=pltpu.CompilerParams(
            # Note: on v7x, pltpu.CORE_PARALLEL on the leading axis (or pl.core_map)
            # may be needed to guarantee the 2-TC split; "parallel" is kept here
            # because it compiles on every generation.
            dimension_semantics=("parallel", "arbitrary"),
            vmem_limit_bytes=VMEM_LIMIT_BYTES),
        cost_estimate=cost,
    )(d0_f, d1_f, jd_f, w1p, w2, b2, w3, b3)

    # Each slice's 128-lane block holds that slice's sum (broadcast); take lane 0.
    slice_sums = partials.reshape(NUM_SLICES, LANES)[:, 0]
    return jnp.sum(slice_sums) / p


def init_params(key, chn_mid=CHN_MID):
    """Deterministic synthetic parameters matching Dist2LogitLayer shapes.

    Mapping from torch:
      conv1.weight (32,5,1,1) -> w1 (32,5); conv1.bias (32,) -> b1 (32,1)
      conv2.weight (32,32,1,1)-> w2 (32,32); conv2.bias (32,) -> b2 (32,1)
      conv3.weight (1,32,1,1) -> w3 (32,1) [transposed]; conv3.bias (1,) -> b3 (1,1)
    """
    k1, k2, k3, k4, k5, k6 = jax.random.split(key, 6)
    w1 = 0.2 * jax.random.normal(k1, (chn_mid, 5), jnp.float32)
    b1 = 0.1 * jax.random.normal(k2, (chn_mid, 1), jnp.float32)
    w2 = 0.2 * jax.random.normal(k3, (chn_mid, chn_mid), jnp.float32)
    b2 = 0.1 * jax.random.normal(k4, (chn_mid, 1), jnp.float32)
    w3 = 0.2 * jax.random.normal(k5, (chn_mid, 1), jnp.float32)
    b3 = 0.1 * jax.random.normal(k6, (1, 1), jnp.float32)
    return (w1, b1, w2, b2, w3, b3)


def _reference(d0, d1, judge, params):
    """Pure-JAX reference of the PyTorch forward (with BCELoss -100 clamps)."""
    w1, b1, w2, b2, w3, b3 = params
    n, c, h, w = d0.shape
    p = n * h * w
    d0f = d0.reshape(p, 1).astype(jnp.float32)
    d1f = d1.reshape(p, 1).astype(jnp.float32)
    jd = judge.reshape(p, 1).astype(jnp.float32)
    feats = jnp.concatenate(
        [d0f, d1f, d0f - d1f, d0f / (d1f + EPS), d1f / (d0f + EPS)], axis=1)
    h1 = feats @ w1.T + b1[:, 0][None, :]
    h1 = jnp.where(h1 >= 0, h1, LRELU_SLOPE * h1)
    h2 = h1 @ w2.T + b2[:, 0][None, :]
    h2 = jnp.where(h2 >= 0, h2, LRELU_SLOPE * h2)
    logit = jax.nn.sigmoid(h2 @ w3 + b3[0, 0])
    per = (jd + 1.0) / 2.0
    bce = -(per * jnp.maximum(jnp.log(logit), -100.0)
            + (1.0 - per) * jnp.maximum(jnp.log(1.0 - logit), -100.0))
    return jnp.mean(bce)


if __name__ == "__main__":
    key = jax.random.PRNGKey(0)
    kp, kd = jax.random.split(key)
    params = init_params(kp)

    # (a) padded/masked small case, (b) non-multiple case, (c) no-padding case,
    # (d) multi-tile accumulation + one fully padded tile.
    shapes = [(2, 1, 16, 16), (1, 1, 10, 10), (2, 1, 128, 128), (2, 1, 256, 192)]
    for shp in shapes:
        k0, k1, kj, kd = jax.random.split(kd, 4)
        # LPIPS distances are non-negative; judge is in [-1, 1].
        d0 = jnp.abs(jax.random.normal(k0, shp, jnp.float32))
        d1 = jnp.abs(jax.random.normal(k1, shp, jnp.float32))
        judge = jax.random.uniform(kj, shp, jnp.float32, -1.0, 1.0)

        loss = jax.block_until_ready(bce_ranking_loss(d0, d1, judge, params))
        ref = _reference(d0, d1, judge, params)
        assert jnp.allclose(loss, ref, rtol=1e-5, atol=1e-5), (shp, float(loss), float(ref))

    # Smoke-check the bf16-MXU fast path on the largest shape (looser tolerance).
    loss_bf16 = jax.block_until_ready(
        bce_ranking_loss(d0, d1, judge, params, use_bf16_matmul=True))
    assert jnp.allclose(loss_bf16, ref, rtol=1e-1, atol=1e-2), (float(loss_bf16), float(ref))

    print("KERNEL_OK")
</pallas_src>

<mosaic_0001>
module attributes {stable_mosaic.version = 11 : i64} {
  func.func @_bce_ranking_kernel(%arg0: i32, %arg1: i32, %arg2: memref<1x1024xf32, #tpu.memory_space<vmem>>, %arg3: memref<1x1024xf32, #tpu.memory_space<vmem>>, %arg4: memref<8x128xf32, #tpu.memory_space<vmem>>, %arg5: memref<32x8xf32, #tpu.memory_space<vmem>>, %arg6: memref<32x32xf32, #tpu.memory_space<vmem>>, %arg7: memref<32x1xf32, #tpu.memory_space<vmem>>, %arg8: memref<32x1xf32, #tpu.memory_space<vmem>>, %arg9: memref<1x1xf32, #tpu.memory_space<smem>>, %arg10: memref<1x128xf32, #tpu.memory_space<vmem>>, %arg11: memref<8x1024xf32, #tpu.memory_space<vmem>>, %arg12: memref<8x128xf32, #tpu.memory_space<vmem>>, %arg13: memref<8x128xf32, #tpu.memory_space<vmem>>) attributes {dimension_semantics = [#tpu.dimension_semantics<parallel>, #tpu.dimension_semantics<arbitrary>], iteration_bounds = array<i64: 2, 1>, scalar_prefetch = 0 : i64, scratch_operands = 3 : i64, tpu.core_type = #tpu.core_type<tc>, window_params = [{transform_indices = @transform_0, window_bounds = array<i64: 1, 1024>}, {transform_indices = @transform_1, window_bounds = array<i64: 1, 1024>}, {transform_indices = @transform_2, window_bounds = array<i64: 8, 128>}, {pipeline_mode = #tpu.pipeline_mode<synchronous>, transform_indices = @transform_3, window_bounds = array<i64: 32, 8>}, {pipeline_mode = #tpu.pipeline_mode<synchronous>, transform_indices = @transform_4, window_bounds = array<i64: 32, 32>}, {pipeline_mode = #tpu.pipeline_mode<synchronous>, transform_indices = @transform_5, window_bounds = array<i64: 32, 1>}, {pipeline_mode = #tpu.pipeline_mode<synchronous>, transform_indices = @transform_6, window_bounds = array<i64: 32, 1>}, {transform_indices = @transform_7, window_bounds = array<i64: 1, 1>}, {transform_indices = @transform_8, window_bounds = array<i64: 1, 128>}]} {
    %c0_i32 = arith.constant 0 : i32
    %0 = arith.cmpi eq, %arg1, %c0_i32 : i32
    %1 = arith.extui %0 : i1 to i32
    %c0_i32_0 = arith.constant 0 : i32
    %2 = arith.cmpi ne, %1, %c0_i32_0 : i32
    scf.if %2 {
      %cst_59 = arith.constant 0.000000e+00 : f32
      %93 = vector.broadcast %cst_59 : f32 to vector<8x128xf32>
      %c0_60 = arith.constant 0 : index
      %c0_61 = arith.constant 0 : index
      %94 = vector.load %arg13[%c0_60, %c0_61] : memref<8x128xf32, #tpu.memory_space<vmem>>, vector<8x128xf32>
      tpu.vector_store %arg13[%c0_60, %c0_61], %93 {strides = array<i32>} : memref<8x128xf32, #tpu.memory_space<vmem>>, vector<8x128xf32>,
      %cst_62 = arith.constant 1.000000e+00 : f32
      %95 = vector.broadcast %cst_62 : f32 to vector<1x1024xf32>
      %c5_63 = arith.constant 5 : index
      %c0_64 = arith.constant 0 : index
      %96 = vector.load %arg11[%c5_63, %c0_64] : memref<8x1024xf32, #tpu.memory_space<vmem>>, vector<1x1024xf32>
      tpu.vector_store %arg11[%c5_63, %c0_64], %95 {strides = array<i32>} : memref<8x1024xf32, #tpu.memory_space<vmem>>, vector<1x1024xf32>,
      %cst_65 = arith.constant 0.000000e+00 : f32
      %97 = vector.broadcast %cst_65 : f32 to vector<2x1024xf32>
      %c6_66 = arith.constant 6 : index
      %c0_67 = arith.constant 0 : index
      %98 = vector.load %arg11[%c6_66, %c0_67] : memref<8x1024xf32, #tpu.memory_space<vmem>>, vector<2x1024xf32>
      tpu.vector_store %arg11[%c6_66, %c0_67], %97 {strides = array<i32>} : memref<8x1024xf32, #tpu.memory_space<vmem>>, vector<2x1024xf32>,
    } else {
    }
    %c0 = arith.constant 0 : index
    %c0_1 = arith.constant 0 : index
    %3 = vector.load %arg2[%c0, %c0_1] : memref<1x1024xf32, #tpu.memory_space<vmem>>, vector<1x1024xf32>
    %c0_2 = arith.constant 0 : index
    %c0_3 = arith.constant 0 : index
    %4 = vector.load %arg3[%c0_2, %c0_3] : memref<1x1024xf32, #tpu.memory_space<vmem>>, vector<1x1024xf32>
    %c0_4 = arith.constant 0 : index
    %c0_5 = arith.constant 0 : index
    %5 = vector.load %arg11[%c0_4, %c0_5] : memref<8x1024xf32, #tpu.memory_space<vmem>>, vector<1x1024xf32>
    tpu.vector_store %arg11[%c0_4, %c0_5], %3 {strides = array<i32>} : memref<8x1024xf32, #tpu.memory_space<vmem>>, vector<1x1024xf32>,
    %c1 = arith.constant 1 : index
    %c0_6 = arith.constant 0 : index
    %6 = vector.load %arg11[%c1, %c0_6] : memref<8x1024xf32, #tpu.memory_space<vmem>>, vector<1x1024xf32>
    tpu.vector_store %arg11[%c1, %c0_6], %4 {strides = array<i32>} : memref<8x1024xf32, #tpu.memory_space<vmem>>, vector<1x1024xf32>,
    %7 = arith.subf %3, %4 : vector<1x1024xf32>
    %c2 = arith.constant 2 : index
    %c0_7 = arith.constant 0 : index
    %8 = vector.load %arg11[%c2, %c0_7] : memref<8x1024xf32, #tpu.memory_space<vmem>>, vector<1x1024xf32>
    tpu.vector_store %arg11[%c2, %c0_7], %7 {strides = array<i32>} : memref<8x1024xf32, #tpu.memory_space<vmem>>, vector<1x1024xf32>,
    %cst = arith.constant 1.000000e-01 : f32
    %9 = vector.broadcast %cst : f32 to vector<1x1024xf32>
    %10 = arith.addf %4, %9 : vector<1x1024xf32>
    %11 = tpu.reciprocal %10 : vector<1x1024xf32> -> vector<1x1024xf32>
    %12 = arith.mulf %3, %11 : vector<1x1024xf32>
    %c3 = arith.constant 3 : index
    %c0_8 = arith.constant 0 : index
    %13 = vector.load %arg11[%c3, %c0_8] : memref<8x1024xf32, #tpu.memory_space<vmem>>, vector<1x1024xf32>
    tpu.vector_store %arg11[%c3, %c0_8], %12 {strides = array<i32>} : memref<8x1024xf32, #tpu.memory_space<vmem>>, vector<1x1024xf32>,
    %cst_9 = arith.constant 1.000000e-01 : f32
    %14 = vector.broadcast %cst_9 : f32 to vector<1x1024xf32>
    %15 = arith.addf %3, %14 : vector<1x1024xf32>
    %16 = tpu.reciprocal %15 : vector<1x1024xf32> -> vector<1x1024xf32>
    %17 = arith.mulf %4, %16 : vector<1x1024xf32>
    %c4 = arith.constant 4 : index
    %c0_10 = arith.constant 0 : index
    %18 = vector.load %arg11[%c4, %c0_10] : memref<8x1024xf32, #tpu.memory_space<vmem>>, vector<1x1024xf32>
    tpu.vector_store %arg11[%c4, %c0_10], %17 {strides = array<i32>} : memref<8x1024xf32, #tpu.memory_space<vmem>>, vector<1x1024xf32>,
    %c0_11 = arith.constant 0 : index
    %c0_12 = arith.constant 0 : index
    %19 = vector.load %arg11[%c0_11, %c0_12] : memref<8x1024xf32, #tpu.memory_space<vmem>>, vector<8x1024xf32>
    %c0_13 = arith.constant 0 : index
    %c0_14 = arith.constant 0 : index
    %20 = vector.load %arg5[%c0_13, %c0_14] : memref<32x8xf32, #tpu.memory_space<vmem>>, vector<32x8xf32>
    %c0_15 = arith.constant 0 : index
    %c0_16 = arith.constant 0 : index
    %21 = vector.load %arg6[%c0_15, %c0_16] : memref<32x32xf32, #tpu.memory_space<vmem>>, vector<32x32xf32>
    %cst_17 = arith.constant dense<0.000000e+00> : vector<32x1024xf32>
    %22 = tpu.matmul %20, %19, %cst_17 {dimension_numbers = #tpu.dot_dimension_numbers<[1], [0], [0], [1], [0, 0, 1, 1], [], []>} : vector<32x8xf32>, vector<8x1024xf32>, vector<32x1024xf32> -> vector<32x1024xf32>
    %cst_18 = arith.constant 2.000000e-01 : f32
    %23 = vector.broadcast %cst_18 : f32 to vector<32x1024xf32>
    %24 = arith.mulf %23, %22 : vector<32x1024xf32>
    %25 = arith.maximumf %22, %24 : vector<32x1024xf32>
    %cst_19 = arith.constant dense<0.000000e+00> : vector<32x1024xf32>
    %26 = tpu.matmul %21, %25, %cst_19 {dimension_numbers = #tpu.dot_dimension_numbers<[1], [0], [0], [1], [0, 0, 1, 1], [], []>} : vector<32x32xf32>, vector<32x1024xf32>, vector<32x1024xf32> -> vector<32x1024xf32>
    %c0_20 = arith.constant 0 : index
    %c0_21 = arith.constant 0 : index
    %27 = vector.load %arg7[%c0_20, %c0_21] : memref<32x1xf32, #tpu.memory_space<vmem>>, vector<32x1xf32>
    %28 = vector.broadcast %27 : vector<32x1xf32> to vector<32x1024xf32>
    %29 = arith.addf %26, %28 : vector<32x1024xf32>
    %cst_22 = arith.constant 2.000000e-01 : f32
    %30 = vector.broadcast %cst_22 : f32 to vector<32x1024xf32>
    %31 = arith.mulf %30, %29 : vector<32x1024xf32>
    %32 = arith.maximumf %29, %31 : vector<32x1024xf32>
    %c0_23 = arith.constant 0 : index
    %c0_24 = arith.constant 0 : index
    %33 = vector.load %arg8[%c0_23, %c0_24] : memref<32x1xf32, #tpu.memory_space<vmem>>, vector<32x1xf32>
    %34 = vector.broadcast %33 : vector<32x1xf32> to vector<32x1024xf32>
    %35 = arith.mulf %34, %32 : vector<32x1024xf32>
    %cst_25 = arith.constant dense<0.000000e+00> : vector<1024xf32>
    %36 = vector.multi_reduction <add>, %35, %cst_25 [0] : vector<32x1024xf32> to vector<1024xf32>
    %37 = vector.shape_cast %36 : vector<1024xf32> to vector<1x1024xf32>
    %38 = vector.extract_strided_slice %37 {offsets = [0, 0], sizes = [1, 128], strides = [1, 1]} : vector<1x1024xf32> to vector<1x128xf32>
    %c0_26 = arith.constant 0 : index
    %c0_27 = arith.constant 0 : index
    %39 = vector.load %arg12[%c0_26, %c0_27] : memref<8x128xf32, #tpu.memory_space<vmem>>, vector<1x128xf32>
    tpu.vector_store %arg12[%c0_26, %c0_27], %38 {strides = array<i32>} : memref<8x128xf32, #tpu.memory_space<vmem>>, vector<1x128xf32>,
    %40 = vector.extract_strided_slice %37 {offsets = [0, 128], sizes = [1, 128], strides = [1, 1]} : vector<1x1024xf32> to vector<1x128xf32>
    %c1_28 = arith.constant 1 : index
    %c0_29 = arith.constant 0 : index
    %41 = vector.load %arg12[%c1_28, %c0_29] : memref<8x128xf32, #tpu.memory_space<vmem>>, vector<1x128xf32>
    tpu.vector_store %arg12[%c1_28, %c0_29], %40 {strides = array<i32>} : memref<8x128xf32, #tpu.memory_space<vmem>>, vector<1x128xf32>,
    %42 = vector.extract_strided_slice %37 {offsets = [0, 256], sizes = [1, 128], strides = [1, 1]} : vector<1x1024xf32> to vector<1x128xf32>
    %c2_30 = arith.constant 2 : index
    %c0_31 = arith.constant 0 : index
    %43 = vector.load %arg12[%c2_30, %c0_31] : memref<8x128xf32, #tpu.memory_space<vmem>>, vector<1x128xf32>
    tpu.vector_store %arg12[%c2_30, %c0_31], %42 {strides = array<i32>} : memref<8x128xf32, #tpu.memory_space<vmem>>, vector<1x128xf32>,
    %44 = vector.extract_strided_slice %37 {offsets = [0, 384], sizes = [1, 128], strides = [1, 1]} : vector<1x1024xf32> to vector<1x128xf32>
    %c3_32 = arith.constant 3 : index
    %c0_33 = arith.constant 0 : index
    %45 = vector.load %arg12[%c3_32, %c0_33] : memref<8x128xf32, #tpu.memory_space<vmem>>, vector<1x128xf32>
    tpu.vector_store %arg12[%c3_32, %c0_33], %44 {strides = array<i32>} : memref<8x128xf32, #tpu.memory_space<vmem>>, vector<1x128xf32>,
    %46 = vector.extract_strided_slice %37 {offsets = [0, 512], sizes = [1, 128], strides = [1, 1]} : vector<1x1024xf32> to vector<1x128xf32>
    %c4_34 = arith.constant 4 : index
    %c0_35 = arith.constant 0 : index
    %47 = vector.load %arg12[%c4_34, %c0_35] : memref<8x128xf32, #tpu.memory_space<vmem>>, vector<1x128xf32>
    tpu.vector_store %arg12[%c4_34, %c0_35], %46 {strides = array<i32>} : memref<8x128xf32, #tpu.memory_space<vmem>>, vector<1x128xf32>,
    %48 = vector.extract_strided_slice %37 {offsets = [0, 640], sizes = [1, 128], strides = [1, 1]} : vector<1x1024xf32> to vector<1x128xf32>
    %c5 = arith.constant 5 : index
    %c0_36 = arith.constant 0 : index
    %49 = vector.load %arg12[%c5, %c0_36] : memref<8x128xf32, #tpu.memory_space<vmem>>, vector<1x128xf32>
    tpu.vector_store %arg12[%c5, %c0_36], %48 {strides = array<i32>} : memref<8x128xf32, #tpu.memory_space<vmem>>, vector<1x128xf32>,
    %50 = vector.extract_strided_slice %37 {offsets = [0, 768], sizes = [1, 128], strides = [1, 1]} : vector<1x1024xf32> to vector<1x128xf32>
    %c6 = arith.constant 6 : index
    %c0_37 = arith.constant 0 : index
    %51 = vector.load %arg12[%c6, %c0_37] : memref<8x128xf32, #tpu.memory_space<vmem>>, vector<1x128xf32>
    tpu.vector_store %arg12[%c6, %c0_37], %50 {strides = array<i32>} : memref<8x128xf32, #tpu.memory_space<vmem>>, vector<1x128xf32>,
    %52 = vector.extract_strided_slice %37 {offsets = [0, 896], sizes = [1, 128], strides = [1, 1]} : vector<1x1024xf32> to vector<1x128xf32>
    %c7 = arith.constant 7 : index
    %c0_38 = arith.constant 0 : index
    %53 = vector.load %arg12[%c7, %c0_38] : memref<8x128xf32, #tpu.memory_space<vmem>>, vector<1x128xf32>
    tpu.vector_store %arg12[%c7, %c0_38], %52 {strides = array<i32>} : memref<8x128xf32, #tpu.memory_space<vmem>>, vector<1x128xf32>,
    %c0_39 = arith.constant 0 : index
    %c0_40 = arith.constant 0 : index
    %54 = vector.load %arg12[%c0_39, %c0_40] : memref<8x128xf32, #tpu.memory_space<vmem>>, vector<8x128xf32>
    %c0_41 = arith.constant 0 : index
    %c0_42 = arith.constant 0 : index
    %55 = memref.load %arg9[%c0_41, %c0_42] : memref<1x1xf32, #tpu.memory_space<smem>>
    %56 = vector.broadcast %55 : f32 to vector<8x128xf32>
    %57 = arith.addf %54, %56 : vector<8x128xf32>
    %c0_43 = arith.constant 0 : index
    %c0_44 = arith.constant 0 : index
    %58 = vector.load %arg4[%c0_43, %c0_44] : memref<8x128xf32, #tpu.memory_space<vmem>>, vector<8x128xf32>
    %cst_45 = arith.constant 1.000000e+00 : f32
    %59 = vector.broadcast %cst_45 : f32 to vector<8x128xf32>
    %60 = arith.addf %58, %59 : vector<8x128xf32>
    %cst_46 = arith.constant 5.000000e-01 : f32
    %61 = vector.broadcast %cst_46 : f32 to vector<8x128xf32>
    %62 = arith.mulf %60, %61 : vector<8x128xf32>
    %cst_47 = arith.constant 0.000000e+00 : f32
    %63 = vector.broadcast %cst_47 : f32 to vector<8x128xf32>
    %64 = arith.subf %63, %57 : vector<8x128xf32>
    %cst_48 = arith.constant 0.000000e+00 : f32
    %65 = vector.broadcast %cst_48 : f32 to vector<8x128xf32>
    %66 = arith.maximumf %64, %65 : vector<8x128xf32>
    %67 = math.absf %57 : vector<8x128xf32>
    %cst_49 = arith.constant 0.000000e+00 : f32
    %68 = vector.broadcast %cst_49 : f32 to vector<8x128xf32>
    %69 = arith.subf %68, %67 : vector<8x128xf32>
    %70 = math.exp %69 : vector<8x128xf32>
    %cst_50 = arith.constant 1.000000e+00 : f32
    %71 = vector.broadcast %cst_50 : f32 to vector<8x128xf32>
    %72 = arith.addf %71, %70 : vector<8x128xf32>
    %73 = math.log %72 : vector<8x128xf32>
    %74 = arith.addf %66, %73 : vector<8x128xf32>
    %cst_51 = arith.constant 1.000000e+00 : f32
    %75 = vector.broadcast %cst_51 : f32 to vector<8x128xf32>
    %76 = arith.subf %75, %62 : vector<8x128xf32>
    %77 = arith.mulf %76, %57 : vector<8x128xf32>
    %78 = arith.addf %74, %77 : vector<8x128xf32>
    %c1_i32 = arith.constant 1 : i32
    %79 = arith.muli %arg0, %c1_i32 : i32
    %80 = arith.addi %79, %arg1 : i32
    %c1024_i32 = arith.constant 1024 : i32
    %81 = arith.muli %80, %c1024_i32 : i32
    %c1024_i32_52 = arith.constant 1024 : i32
    %82 = arith.addi %81, %c1024_i32_52 : i32
    %c512_i32 = arith.constant 512 : i32
    %83 = arith.cmpi sle, %82, %c512_i32 : i32
    %84 = arith.extui %83 : i1 to i32
    %c0_i32_53 = arith.constant 0 : i32
    %85 = arith.cmpi ne, %84, %c0_i32_53 : i32
    scf.if %85 {
      %c0_59 = arith.constant 0 : index
      %c0_60 = arith.constant 0 : index
      %93 = vector.load %arg13[%c0_59, %c0_60] : memref<8x128xf32, #tpu.memory_space<vmem>>, vector<8x128xf32>
      %94 = arith.addf %93, %78 : vector<8x128xf32>
      %c0_61 = arith.constant 0 : index
      %c0_62 = arith.constant 0 : index
      %95 = vector.load %arg13[%c0_61, %c0_62] : memref<8x128xf32, #tpu.memory_space<vmem>>, vector<8x128xf32>
      tpu.vector_store %arg13[%c0_61, %c0_62], %94 {strides = array<i32>} : memref<8x128xf32, #tpu.memory_space<vmem>>, vector<8x128xf32>,
    } else {
    }
    %c1024_i32_54 = arith.constant 1024 : i32
    %86 = arith.addi %81, %c1024_i32_54 : i32
    %c512_i32_55 = arith.constant 512 : i32
    %87 = arith.cmpi sgt, %86, %c512_i32_55 : i32
    %88 = arith.extui %87 : i1 to i32
    %c0_i32_56 = arith.constant 0 : i32
    %89 = arith.cmpi ne, %88, %c0_i32_56 : i32
    scf.if %89 {
      %93 = tpu.iota {dimensions = array<i32: 0>} : vector<8x128xi32>
      %94 = tpu.iota {dimensions = array<i32: 1>} : vector<8x128xi32>
      %c128_i32 = arith.constant 128 : i32
      %95 = vector.broadcast %c128_i32 : i32 to vector<8x128xi32>
      %96 = arith.muli %93, %95 : vector<8x128xi32>
      %97 = vector.broadcast %81 : i32 to vector<8x128xi32>
      %98 = arith.addi %97, %96 : vector<8x128xi32>
      %99 = arith.addi %98, %94 : vector<8x128xi32>
      %c0_59 = arith.constant 0 : index
      %c0_60 = arith.constant 0 : index
      %100 = vector.load %arg13[%c0_59, %c0_60] : memref<8x128xf32, #tpu.memory_space<vmem>>, vector<8x128xf32>
      %c512_i32_61 = arith.constant 512 : i32
      %101 = vector.broadcast %c512_i32_61 : i32 to vector<8x128xi32>
      %102 = arith.cmpi slt, %99, %101 : vector<8x128xi32>
      %cst_62 = arith.constant 0.000000e+00 : f32
      %103 = vector.broadcast %cst_62 : f32 to vector<8x128xf32>
      %104 = arith.select %102, %78, %103 : vector<8x128xi1>, vector<8x128xf32>
      %105 = arith.addf %100, %104 : vector<8x128xf32>
      %c0_63 = arith.constant 0 : index
      %c0_64 = arith.constant 0 : index
      %106 = vector.load %arg13[%c0_63, %c0_64] : memref<8x128xf32, #tpu.memory_space<vmem>>, vector<8x128xf32>
      tpu.vector_store %arg13[%c0_63, %c0_64], %105 {strides = array<i32>} : memref<8x128xf32, #tpu.memory_space<vmem>>, vector<8x128xf32>,
    } else {
    }
    %c0_i32_57 = arith.constant 0 : i32
    %90 = arith.cmpi eq, %arg1, %c0_i32_57 : i32
    %91 = arith.extui %90 : i1 to i32
    %c0_i32_58 = arith.constant 0 : i32
    %92 = arith.cmpi ne, %91, %c0_i32_58 : i32
    scf.if %92 {
      %c0_59 = arith.constant 0 : index
      %c0_60 = arith.constant 0 : index
      %93 = vector.load %arg13[%c0_59, %c0_60] : memref<8x128xf32, #tpu.memory_space<vmem>>, vector<8x128xf32>
      %cst_61 = arith.constant dense<0.000000e+00> : vector<8xf32>
      %94 = vector.multi_reduction <add>, %93, %cst_61 [1] : vector<8x128xf32> to vector<8xf32>
      %95 = vector.shape_cast %94 : vector<8xf32> to vector<8x1xf32>
      %cst_62 = arith.constant dense<0.000000e+00> : vector<1xf32>
      %96 = vector.multi_reduction <add>, %95, %cst_62 [0] : vector<8x1xf32> to vector<1xf32>
      %97 = vector.shape_cast %96 : vector<1xf32> to vector<1x1xf32>
      %cst_63 = arith.constant 0.000000e+00 : f32
      %98 = vector.broadcast %cst_63 : f32 to vector<1x128xf32>
      %99 = vector.broadcast %97 : vector<1x1xf32> to vector<1x128xf32>
      %100 = arith.addf %98, %99 : vector<1x128xf32>
      %c0_64 = arith.constant 0 : index
      %c0_65 = arith.constant 0 : index
      %101 = vector.load %arg10[%c0_64, %c0_65] : memref<1x128xf32, #tpu.memory_space<vmem>>, vector<1x128xf32>
      tpu.vector_store %arg10[%c0_64, %c0_65], %100 {strides = array<i32>} : memref<1x128xf32, #tpu.memory_space<vmem>>, vector<1x128xf32>,
    } else {
    }
    return
  }
  func.func @transform_0(%arg0: i32, %arg1: i32) -> (i32, i32) {
    %c1_i32 = arith.constant 1 : i32
    %0 = arith.muli %arg0, %c1_i32 : i32
    %1 = arith.addi %0, %arg1 : i32
    %c0_i32 = arith.constant 0 : i32
    %c0_i32_0 = arith.constant 0 : i32
    return %c0_i32, %1 : i32, i32
  }
  func.func @transform_1(%arg0: i32, %arg1: i32) -> (i32, i32) {
    %c1_i32 = arith.constant 1 : i32
    %0 = arith.muli %arg0, %c1_i32 : i32
    %1 = arith.addi %0, %arg1 : i32
    %c0_i32 = arith.constant 0 : i32
    %c0_i32_0 = arith.constant 0 : i32
    return %c0_i32, %1 : i32, i32
  }
  func.func @transform_2(%arg0: i32, %arg1: i32) -> (i32, i32) {
    %c1_i32 = arith.constant 1 : i32
    %0 = arith.muli %arg0, %c1_i32 : i32
    %1 = arith.addi %0, %arg1 : i32
    %c0_i32 = arith.constant 0 : i32
    %c0_i32_0 = arith.constant 0 : i32
    return %1, %c0_i32 : i32, i32
  }
  func.func @transform_3(%arg0: i32, %arg1: i32) -> (i32, i32) {
    %c0_i32 = arith.constant 0 : i32
    %c0_i32_0 = arith.constant 0 : i32
    %c0_i32_1 = arith.constant 0 : i32
    return %c0_i32, %c0_i32_0 : i32, i32
  }
  func.func @transform_4(%arg0: i32, %arg1: i32) -> (i32, i32) {
    %c0_i32 = arith.constant 0 : i32
    %c0_i32_0 = arith.constant 0 : i32
    %c0_i32_1 = arith.constant 0 : i32
    return %c0_i32, %c0_i32_0 : i32, i32
  }
  func.func @transform_5(%arg0: i32, %arg1: i32) -> (i32, i32) {
    %c0_i32 = arith.constant 0 : i32
    %c0_i32_0 = arith.constant 0 : i32
    %c0_i32_1 = arith.constant 0 : i32
    return %c0_i32, %c0_i32_0 : i32, i32
  }
  func.func @transform_6(%arg0: i32, %arg1: i32) -> (i32, i32) {
    %c0_i32 = arith.constant 0 : i32
    %c0_i32_0 = arith.constant 0 : i32
    %c0_i32_1 = arith.constant 0 : i32
    return %c0_i32, %c0_i32_0 : i32, i32
  }
  func.func @transform_7(%arg0: i32, %arg1: i32) -> (i32, i32) {
    %c0_i32 = arith.constant 0 : i32
    %c0_i32_0 = arith.constant 0 : i32
    %c0_i32_1 = arith.constant 0 : i32
    return %c0_i32, %c0_i32_0 : i32, i32
  }
  func.func @transform_8(%arg0: i32, %arg1: i32) -> (i32, i32) {
    %c0_i32 = arith.constant 0 : i32
    %c0_i32_0 = arith.constant 0 : i32
    return %c0_i32, %arg0 : i32, i32
  }
}

</mosaic_0001>

<llo_original>
// kernel: tpu_custom_call.1
$region0: #{tpu_custom_call.1}
  #allocation0 [shape = 'u32[]', space=smem, size = 0x4, offset = 0x4, fixed_abs, tag = 'smem constant byte address 0x4 - core index']
  #allocation1 [shape = 'u32[72,128]{1,0:T(1,128)}', space=vmem, size = 0x9000, scoped, tag = 'internal scratch']
  #allocation2 [shape = 'f32[8,1024]{1,0:T(8,128)}', space=vmem, size = 0x8000, scoped, tag = 'scratch operand']
  #allocation3 [shape = 'f32[8,128]{1,0:T(8,128)}', space=vmem, size = 0x1000, scoped, tag = 'scratch operand']
  #allocation4 [shape = 'f32[8,128]{1,0:T(8,128)}', space=vmem, size = 0x1000, scoped, tag = 'scratch operand']
  #allocation5 [shape = 'f32[1,1]{1,0:T(1,128)S(6)}', space=smem, size = 0x200, scoped, tag = 'scoped memory for tpu_custom_call.1']
  %s0 = inlined_call_operand.vmem [shape: f32[1,2048], index: 0, kind: input, shape index: {}]
  %s1 = inlined_call_operand.vmem [shape: f32[1,2048], index: 1, kind: input, shape index: {}]
  %s2 = inlined_call_operand.vmem [shape: f32[16,128], index: 2, kind: input, shape index: {}]
  %s3 = inlined_call_operand.vmem [shape: f32[32,8], index: 3, kind: input, shape index: {}]
  %s4 = inlined_call_operand.vmem [shape: f32[32,32], index: 4, kind: input, shape index: {}]
  %s5 = inlined_call_operand.vmem [shape: f32[32,1], index: 5, kind: input, shape index: {}]
  %s6 = inlined_call_operand.vmem [shape: f32[32,1], index: 6, kind: input, shape index: {}]
  %s7 = inlined_call_operand.<no memory space> [shape: f32[1,1], index: 7, kind: input, shape index: {}]
  %s8 = inlined_call_operand.hbm [shape: f32[1,256], index: 8, kind: output, shape index: {}]
  %s9 = sld [smem:[#allocation0]]
  $region81: #{tpu_custom_call.1} parent=0
    _
  %s11 = ssub.s32 1, %s9
  %s12 = scalar_select 0, %s11, %s9
  %13 = sst [smem:[#allocation5]] %s7
  $region1: #{tpu_custom_call.1} parent=0
    #allocation6 [shape = 'u8[1024]{0}', space=vmem, size = 0x400, scoped, tag = 'output window, operand 0']
    #allocation7 [shape = 's32[2]{0}', space=sflag, size = 0x8, scoped, tag = 'scoped memory for tpu_custom_call.1']
    %14 = vsyncpa [#allocation7], 0
    %s15 = scalar_lea.sflag [#allocation7], 1
    %16 = vsyncpa %s15, 0
    loop: start=0, step=1, limit=4
    $region2: #{tpu_custom_call.1} parent=1 // loop_pre_header
      _
    $region3: #{tpu_custom_call.1} parent=1 // loop_header
      %s18 = sphi 0, %s22
      %p19 = scmp.ge.s32.totalorder %s18, 4
      %s25 = sphi 0, %s37
      %s26 = sphi 0, %s33
      %s27 = sphi 0, %s25
      %s28 = sphi 0, %s26
      %s29 = sphi 0, %s27
      %s30 = sphi 0, %s28
      %s42 = sphi 0, %s44
      %s45 = sphi 0, %s42
      %s46 = sphi 0, %s45
      %s62 = sphi 0, %s46
      %s70 = sphi 0, %s72
      %s73 = sphi 0, %s70
      %s74 = sphi 0, %s73
      %s90 = sphi 0, %s74
      %s98 = sphi 0, %s100
      %s101 = sphi 0, %s98
      %s102 = sphi 0, %s101
      %s118 = sphi 0, %s102
      %s122 = sphi 0, %s122
      %s124 = sphi 0, %s122
      %s125 = sphi 0, %s124
      %s139 = sphi 0, %s125
      %s143 = sphi 0, %s143
      %s145 = sphi 0, %s143
      %s146 = sphi 0, %s145
      %s160 = sphi 0, %s146
      %s164 = sphi 0, %s164
      %s166 = sphi 0, %s164
      %s167 = sphi 0, %s166
      %s181 = sphi 0, %s167
      %s185 = sphi 0, %s185
      %s187 = sphi 0, %s185
      %s188 = sphi 0, %s187
      %s202 = sphi 0, %s188
      %s206 = sphi 0, %s206
      %s208 = sphi 0, %s206
      %s209 = sphi 0, %s208
      %s223 = sphi 0, %s209
      %s229 = sphi 0, %s231
      %s232 = sphi 0, %s229
      %s233 = sphi 0, %s232
      %s249 = sphi 0, %s233
    $region4: #{tpu_custom_call.1} parent=1 // loop_header_branch
      %21 = sbr.rel (%p19) target = $region8
    $region5: #{tpu_custom_call.1} parent=1 // loop_body
      %s23 = ssub.s32 %s18, 1
      %s24 = ssub.s32 %s18, 2
      %s31 = sadd.s32 1, %s26
      %p32 = scmp.ge.s32.totalorder %s31, 1
      %s33 = scalar_select %p32, 0, %s31
      %s34 = sadd.s32 1, %s25
      %s35 = scalar_select %p32, %s34, %s25
      %p36 = scmp.ge.s32.totalorder %s35, 2
      %s37 = scalar_select %p36, 0, %s35
      %s38 = sadd.s32 %s25, %s26
      %s39 = sadd.s32 %s37, %s33
      %s40 = ssub.s32 %s38, %s39
      %p41 = scmp.eq.s32.totalorder %s40, 0
      %s43 = sadd.s32 %s42, 1
      %s44 = scalar_select %p41, %s42, %s43
      %p47 = pneg %p41
      %p48 = scmp.eq.s32.totalorder %s18, 1
      %p49 = por %p47, %p48
      %p50 = scmp.ne.s32.totalorder %s42, %s45
      %p51 = scmp.eq.s32.totalorder %s18, 0
      %p52 = por %p50, %p51
      %p53 = scmp.ne.s32.totalorder %s42, %s45
      %p54 = scmp.eq.s32.totalorder %s23, 1
      %p55 = por %p53, %p54
      %p56 = scmp.ne.s32.totalorder %s45, %s46
      %p57 = scmp.eq.s32.totalorder %s23, 0
      %p58 = por %p56, %p57
      %p59 = scmp.ne.s32.totalorder %s45, %s46
      %p60 = scmp.eq.s32.totalorder %s24, 1
      %p61 = por %p59, %p60
      %p63 = scmp.ne.s32.totalorder %s46, %s62
      %p64 = scmp.eq.s32.totalorder %s24, 0
      %p65 = por %p63, %p64
      %s66 = sadd.s32 %s25, %s26
      %s67 = sadd.s32 %s37, %s33
      %s68 = ssub.s32 %s66, %s67
      %p69 = scmp.eq.s32.totalorder %s68, 0
      %s71 = sadd.s32 %s70, 1
      %s72 = scalar_select %p69, %s70, %s71
      %p75 = pneg %p69
      %p76 = scmp.eq.s32.totalorder %s18, 1
      %p77 = por %p75, %p76
      %p78 = scmp.ne.s32.totalorder %s70, %s73
      %p79 = scmp.eq.s32.totalorder %s18, 0
      %p80 = por %p78, %p79
      %p81 = scmp.ne.s32.totalorder %s70, %s73
      %p82 = scmp.eq.s32.totalorder %s23, 1
      %p83 = por %p81, %p82
      %p84 = scmp.ne.s32.totalorder %s73, %s74
      %p85 = scmp.eq.s32.totalorder %s23, 0
      %p86 = por %p84, %p85
      %p87 = scmp.ne.s32.totalorder %s73, %s74
      %p88 = scmp.eq.s32.totalorder %s24, 1
      %p89 = por %p87, %p88
      %p91 = scmp.ne.s32.totalorder %s74, %s90
      %p92 = scmp.eq.s32.totalorder %s24, 0
      %p93 = por %p91, %p92
      %s94 = sadd.s32 %s25, %s26
      %s95 = sadd.s32 %s37, %s33
      %s96 = ssub.s32 %s94, %s95
      %p97 = scmp.eq.s32.totalorder %s96, 0
      %s99 = sadd.s32 %s98, 1
      %s100 = scalar_select %p97, %s98, %s99
      %p103 = pneg %p97
      %p104 = scmp.eq.s32.totalorder %s18, 1
      %p105 = por %p103, %p104
      %p106 = scmp.ne.s32.totalorder %s98, %s101
      %p107 = scmp.eq.s32.totalorder %s18, 0
      %p108 = por %p106, %p107
      %p109 = scmp.ne.s32.totalorder %s98, %s101
      %p110 = scmp.eq.s32.totalorder %s23, 1
      %p111 = por %p109, %p110
      %p112 = scmp.ne.s32.totalorder %s101, %s102
      %p113 = scmp.eq.s32.totalorder %s23, 0
      %p114 = por %p112, %p113
      %p115 = scmp.ne.s32.totalorder %s101, %s102
      %p116 = scmp.eq.s32.totalorder %s24, 1
      %p117 = por %p115, %p116
      %p119 = scmp.ne.s32.totalorder %s102, %s118
      %p120 = scmp.eq.s32.totalorder %s24, 0
      %p121 = por %p119, %p120
      %s123 = sadd.s32 %s122, 1
      %p126 = scmp.eq.s32.totalorder %s18, 1
      %p127 = scmp.ne.s32.totalorder %s122, %s124
      %p128 = scmp.eq.s32.totalorder %s18, 0
      %p129 = por %p127, %p128
      %p130 = scmp.ne.s32.totalorder %s122, %s124
      %p131 = scmp.eq.s32.totalorder %s23, 1
      %p132 = por %p130, %p131
      %p133 = scmp.ne.s32.totalorder %s124, %s125
      %p134 = scmp.eq.s32.totalorder %s23, 0
      %p135 = por %p133, %p134
      %p136 = scmp.ne.s32.totalorder %s124, %s125
      %p137 = scmp.eq.s32.totalorder %s24, 1
      %p138 = por %p136, %p137
      %p140 = scmp.ne.s32.totalorder %s125, %s139
      %p141 = scmp.eq.s32.totalorder %s24, 0
      %p142 = por %p140, %p141
      %s144 = sadd.s32 %s143, 1
      %p147 = scmp.eq.s32.totalorder %s18, 1
      %p148 = scmp.ne.s32.totalorder %s143, %s145
      %p149 = scmp.eq.s32.totalorder %s18, 0
      %p150 = por %p148, %p149
      %p151 = scmp.ne.s32.totalorder %s143, %s145
      %p152 = scmp.eq.s32.totalorder %s23, 1
      %p153 = por %p151, %p152
      %p154 = scmp.ne.s32.totalorder %s145, %s146
      %p155 = scmp.eq.s32.totalorder %s23, 0
      %p156 = por %p154, %p155
      %p157 = scmp.ne.s32.totalorder %s145, %s146
      %p158 = scmp.eq.s32.totalorder %s24, 1
      %p159 = por %p157, %p158
      %p161 = scmp.ne.s32.totalorder %s146, %s160
      %p162 = scmp.eq.s32.totalorder %s24, 0
      %p163 = por %p161, %p162
      %s165 = sadd.s32 %s164, 1
      %p168 = scmp.eq.s32.totalorder %s18, 1
      %p169 = scmp.ne.s32.totalorder %s164, %s166
      %p170 = scmp.eq.s32.totalorder %s18, 0
      %p171 = por %p169, %p170
      %p172 = scmp.ne.s32.totalorder %s164, %s166
      %p173 = scmp.eq.s32.totalorder %s23, 1
      %p174 = por %p172, %p173
      %p175 = scmp.ne.s32.totalorder %s166, %s167
      %p176 = scmp.eq.s32.totalorder %s23, 0
      %p177 = por %p175, %p176
      %p178 = scmp.ne.s32.totalorder %s166, %s167
      %p179 = scmp.eq.s32.totalorder %s24, 1
      %p180 = por %p178, %p179
      %p182 = scmp.ne.s32.totalorder %s167, %s181
      %p183 = scmp.eq.s32.totalorder %s24, 0
      %p184 = por %p182, %p183
      %s186 = sadd.s32 %s185, 1
      %p189 = scmp.eq.s32.totalorder %s18, 1
      %p190 = scmp.ne.s32.totalorder %s185, %s187
      %p191 = scmp.eq.s32.totalorder %s18, 0
      %p192 = por %p190, %p191
      %p193 = scmp.ne.s32.totalorder %s185, %s187
      %p194 = scmp.eq.s32.totalorder %s23, 1
      %p195 = por %p193, %p194
      %p196 = scmp.ne.s32.totalorder %s187, %s188
      %p197 = scmp.eq.s32.totalorder %s23, 0
      %p198 = por %p196, %p197
      %p199 = scmp.ne.s32.totalorder %s187, %s188
      %p200 = scmp.eq.s32.totalorder %s24, 1
      %p201 = por %p199, %p200
      %p203 = scmp.ne.s32.totalorder %s188, %s202
      %p204 = scmp.eq.s32.totalorder %s24, 0
      %p205 = por %p203, %p204
      %s207 = sadd.s32 %s206, 1
      %p210 = scmp.eq.s32.totalorder %s18, 1
      %p211 = scmp.ne.s32.totalorder %s206, %s208
      %p212 = scmp.eq.s32.totalorder %s18, 0
      %p213 = por %p211, %p212
      %p214 = scmp.ne.s32.totalorder %s206, %s208
      %p215 = scmp.eq.s32.totalorder %s23, 1
      %p216 = por %p214, %p215
      %p217 = scmp.ne.s32.totalorder %s208, %s209
      %p218 = scmp.eq.s32.totalorder %s23, 0
      %p219 = por %p217, %p218
      %p220 = scmp.ne.s32.totalorder %s208, %s209
      %p221 = scmp.eq.s32.totalorder %s24, 1
      %p222 = por %p220, %p221
      %p224 = scmp.ne.s32.totalorder %s209, %s223
      %p225 = scmp.eq.s32.totalorder %s24, 0
      %p226 = por %p224, %p225
      %s227 = ssub.s32 %s25, %s37
      %p228 = scmp.eq.s32.totalorder %s227, 0
      %s230 = sadd.s32 %s229, 1
      %s231 = scalar_select %p228, %s229, %s230
      %p234 = pneg %p228
      %p235 = scmp.eq.s32.totalorder %s18, 1
      %p236 = por %p234, %p235
      %p237 = scmp.ne.s32.totalorder %s229, %s232
      %p238 = scmp.eq.s32.totalorder %s18, 0
      %p239 = por %p237, %p238
      %p240 = scmp.ne.s32.totalorder %s229, %s232
      %p241 = scmp.eq.s32.totalorder %s23, 1
      %p242 = por %p240, %p241
      %p243 = scmp.ne.s32.totalorder %s232, %s233
      %p244 = scmp.eq.s32.totalorder %s23, 0
      %p245 = por %p243, %p244
      %p246 = scmp.ne.s32.totalorder %s232, %s233
      %p247 = scmp.eq.s32.totalorder %s24, 1
      %p248 = por %p246, %p247
      %p250 = scmp.ne.s32.totalorder %s233, %s249
      %p251 = scmp.eq.s32.totalorder %s24, 0
      %p252 = por %p250, %p251
      %p253 = scmp.le.s32.totalorder 1, %s18
      %p254 = scmp.lt.s32.totalorder %s18, 3
      %p255 = pnand %p253, %p254
      %p256 = pneg %p255
      // Predicated region
      $region9: #{tpu_custom_call.1} parent=5 // pred_check
        _
      $region10: #{tpu_custom_call.1} parent=5 // pred_check_branch
        %258 = sbr.rel (%p255) target = $region12
      $region11: #{tpu_custom_call.1} parent=5 // pred_region
        %s259 = ssub.s32 %s18, 1
        // Predicated region
        $region13: #{tpu_custom_call.1} parent=11 // pred_check
          %p260 = pneg %p135
        $region14: #{tpu_custom_call.1} parent=11 // pred_check_branch
          %262 = sbr.rel (%p260) target = $region16
        $region15: #{tpu_custom_call.1} parent=11 // pred_region
          _
        $region16: #{tpu_custom_call.1} parent=11 // pred_fallthru
          _
        // Predicated region
        $region17: #{tpu_custom_call.1} parent=11 // pred_check
          %p263 = pneg %p156
        $region18: #{tpu_custom_call.1} parent=11 // pred_check_branch
          %265 = sbr.rel (%p263) target = $region20
        $region19: #{tpu_custom_call.1} parent=11 // pred_region
          _
        $region20: #{tpu_custom_call.1} parent=11 // pred_fallthru
          _
        // Predicated region
        $region21: #{tpu_custom_call.1} parent=11 // pred_check
          %p266 = pneg %p177
        $region22: #{tpu_custom_call.1} parent=11 // pred_check_branch
          %268 = sbr.rel (%p266) target = $region24
        $region23: #{tpu_custom_call.1} parent=11 // pred_region
          _
        $region24: #{tpu_custom_call.1} parent=11 // pred_fallthru
          _
        // Predicated region
        $region25: #{tpu_custom_call.1} parent=11 // pred_check
          %p269 = pneg %p198
        $region26: #{tpu_custom_call.1} parent=11 // pred_check_branch
          %271 = sbr.rel (%p269) target = $region28
        $region27: #{tpu_custom_call.1} parent=11 // pred_region
          _
        $region28: #{tpu_custom_call.1} parent=11 // pred_fallthru
          _
        // Predicated region
        $region29: #{tpu_custom_call.1} parent=11 // pred_check
          %p272 = pneg %p219
        $region30: #{tpu_custom_call.1} parent=11 // pred_check_branch
          %274 = sbr.rel (%p272) target = $region32
        $region31: #{tpu_custom_call.1} parent=11 // pred_region
          _
        $region32: #{tpu_custom_call.1} parent=11 // pred_fallthru
          _
      $region12: #{tpu_custom_call.1} parent=5 // pred_fallthru
        _
      %p275 = scmp.lt.s32.totalorder %s18, 2
      // Predicated region
      $region33: #{tpu_custom_call.1} parent=5 // pred_check
        %p276 = pneg %p275
      $region34: #{tpu_custom_call.1} parent=5 // pred_check_branch
        %278 = sbr.rel (%p276) target = $region36
      $region35: #{tpu_custom_call.1} parent=5 // pred_region
        // Predicated region
        $region37: #{tpu_custom_call.1} parent=35 // pred_check
          %p279 = pneg %p52
        $region38: #{tpu_custom_call.1} parent=35 // pred_check_branch
          %281 = sbr.rel (%p279) target = $region40
        $region39: #{tpu_custom_call.1} parent=35 // pred_region
          %s282 = sadd.s32 %s25, %s26
          %s283 = smul.u32 8, %s282
          %p284 = scmp.lt.s32.totalorder %s283, 15
          %s285 = scalar_select %p284, %s283, 15
          %s286 = scalar_lea.vmem %s0, %s285
          %s287 = sadd.s32 %s25, %s26
          %s288 = smul.u32 8, %s287
        $region40: #{tpu_custom_call.1} parent=35 // pred_fallthru
          _
        // Predicated region
        $region41: #{tpu_custom_call.1} parent=35 // pred_check
          %p289 = pneg %p80
        $region42: #{tpu_custom_call.1} parent=35 // pred_check_branch
          %291 = sbr.rel (%p289) target = $region44
        $region43: #{tpu_custom_call.1} parent=35 // pred_region
          %s292 = sadd.s32 %s25, %s26
          %s293 = smul.u32 8, %s292
          %p294 = scmp.lt.s32.totalorder %s293, 15
          %s295 = scalar_select %p294, %s293, 15
          %s296 = scalar_lea.vmem %s1, %s295
          %s297 = sadd.s32 %s25, %s26
          %s298 = smul.u32 8, %s297
        $region44: #{tpu_custom_call.1} parent=35 // pred_fallthru
          _
        // Predicated region
        $region45: #{tpu_custom_call.1} parent=35 // pred_check
          %p299 = pneg %p108
        $region46: #{tpu_custom_call.1} parent=35 // pred_check_branch
          %301 = sbr.rel (%p299) target = $region48
        $region47: #{tpu_custom_call.1} parent=35 // pred_region
          %s302 = sadd.s32 %s25, %s26
          %p303 = scmp.lt.s32.totalorder %s302, 1
          %s304 = scalar_select %p303, %s302, 1
          %s305 = smul.addr %s304, 8
          %s306 = scalar_lea.vmem %s2, %s305
          %s307 = sadd.s32 %s25, %s26
        $region48: #{tpu_custom_call.1} parent=35 // pred_fallthru
          _
      $region36: #{tpu_custom_call.1} parent=5 // pred_fallthru
        _
      %p308 = scmp.le.s32.totalorder 1, %s18
      %p309 = scmp.lt.s32.totalorder %s18, 3
      %p310 = pnand %p308, %p309
      %p311 = pneg %p310
      // Predicated region
      $region49: #{tpu_custom_call.1} parent=5 // pred_check
        _
      $region50: #{tpu_custom_call.1} parent=5 // pred_check_branch
        %313 = sbr.rel (%p310) target = $region52
      $region51: #{tpu_custom_call.1} parent=5 // pred_region
        %s314 = ssub.s32 %s18, 1
        %s315 = sadd.s32 %s27, %s28
        %s316 = smul.u32 8, %s315
        %p317 = scmp.lt.s32.totalorder %s316, 15
        %s318 = scalar_select %p317, %s316, 15
        %s319 = scalar_lea.vmem %s0, %s318
        %p320 = pneg %p58
        %p321 = pneg %p55
        %s322 = sadd.s32 %s27, %s28
        %s323 = smul.u32 8, %s322
        %p324 = scmp.lt.s32.totalorder %s323, 15
        %s325 = scalar_select %p324, %s323, 15
        %s326 = scalar_lea.vmem %s1, %s325
        %p327 = pneg %p86
        %p328 = pneg %p83
        %s329 = sadd.s32 %s27, %s28
        %p330 = scmp.lt.s32.totalorder %s329, 1
        %s331 = scalar_select %p330, %s329, 1
        %s332 = smul.addr %s331, 8
        %s333 = scalar_lea.vmem %s2, %s332
        %p334 = pneg %p114
        %p335 = pneg %p111
        %p336 = pneg %p135
        %p337 = pneg %p132
        %p338 = pneg %p156
        %p339 = pneg %p153
        %p340 = pneg %p177
        %p341 = pneg %p174
        %p342 = pneg %p198
        %p343 = pneg %p195
        %p344 = pneg %p219
        %p345 = pneg %p216
        %p346 = pneg %p245
        %p347 = pneg %p242
        %s348 = sand.u32 %s232, 1
        %s349 = scalar_lea.sflag [#allocation7], %s348
        %s350 = sand.u32 %s232, 1
        %s351 = scalar_lea.vmem [#allocation6], %s350
        %s352 = sadd.s32 %s27, %s28
        %s353 = smul.u32 8, %s352
        %p354 = scmp.lt.s32.totalorder %s353, 15
        %s355 = scalar_select %p354, %s353, 15
        %s356 = scalar_lea.vmem %s0, %s355
        %s357 = sadd.s32 %s27, %s28
        %s358 = smul.u32 8, %s357
        %s359 = sadd.s32 %s27, %s28
        %s360 = smul.u32 8, %s359
        %p361 = scmp.lt.s32.totalorder %s360, 15
        %s362 = scalar_select %p361, %s360, 15
        %s363 = scalar_lea.vmem %s1, %s362
        %s364 = sadd.s32 %s27, %s28
        %s365 = smul.u32 8, %s364
        %s366 = sadd.s32 %s27, %s28
        %p367 = scmp.lt.s32.totalorder %s366, 1
        %s368 = scalar_select %p367, %s366, 1
        %s369 = smul.addr %s368, 8
        %s370 = scalar_lea.vmem %s2, %s369
        %s371 = sadd.s32 %s27, %s28
        %p372 = scmp.eq.s32.totalorder %s28, 0
        // Predicated region
        $region53: #{tpu_custom_call.1} parent=51 // pred_check
          %p373 = pneg %p372
        $region54: #{tpu_custom_call.1} parent=51 // pred_check_branch
          %375 = sbr.rel (%p373) target = $region56
        $region55: #{tpu_custom_call.1} parent=51 // pred_region
          %376 = vst [vmem:[#allocation4] sm:$0xff] 0.0
          %s377 = scalar_lea.vmem [#allocation2], 5
          %378 = vst [vmem:[%s377] ss:$8 sm:$0xf] 1.0
          %379 = vst [vmem:[%s377] ss:$8 sm:$0xf0] 1.0
          %380 = vst [vmem:[#allocation2] sm:$0xc0] 0.0
          %381 = vst [vmem:[#allocation2 + $0x8] sm:$0xc0] 0.0
          %382 = vst [vmem:[#allocation2 + $0x10] sm:$0xc0] 0.0
          %383 = vst [vmem:[#allocation2 + $0x18] sm:$0xc0] 0.0
          %384 = vst [vmem:[#allocation2 + $0x20] sm:$0xc0] 0.0
          %385 = vst [vmem:[#allocation2 + $0x28] sm:$0xc0] 0.0
          %386 = vst [vmem:[#allocation2 + $0x30] sm:$0xc0] 0.0
          %387 = vst [vmem:[#allocation2 + $0x38] sm:$0xc0] 0.0
        $region56: #{tpu_custom_call.1} parent=51 // pred_fallthru
          _
        %v388 = vld [vmem:[%s356] sm:$0xff]
        %v389 = vld [vmem:[%s363] sm:$0xff]
        %390 = vst [vmem:[#allocation2] ss:$8 sm:$0xf] %v388
        %391 = vst [vmem:[#allocation2] ss:$8 sm:$0xf0] %v388
        %s392 = scalar_lea.vmem [#allocation2], 1
        %393 = vst [vmem:[%s392] ss:$8 sm:$0xf] %v389
        %394 = vst [vmem:[%s392] ss:$8 sm:$0xf0] %v389
        %v395 = vsub.f32 %v388, %v389
        %s396 = scalar_lea.vmem [#allocation2], 2
        %397 = vst [vmem:[%s396] ss:$8 sm:$0xf] %v395
        %398 = vst [vmem:[%s396] ss:$8 sm:$0xf0] %v395
        %v399 = vadd.f32 %v389, 0.1
        %v400 = vrcp.pop %v399
        %v401 = vmul.f32 %v399, %v400
        %v402 = vsub.f32 1.0, %v401
        %v403 = vmul.f32 %v400, %v402
        %v404 = vadd.f32 %v400, %v403
        %vm405 = vweird.f32 %v399
        %vm406 = vweird.f32 %v400
        %vm407 = vmor %vm405, %vm406
        %v408 = vsel %vm407, %v400, %v404
        %v409 = vand.u32 2147483647, %v399
        %vm410 = vcmp.eq.f32.partialorder %v409, 8.507059e+37
        %v411 = vand.u32 %v399, 2147483648
        %v412 = vor.u32 1.1754944e-38, %v411
        %v413 = vsel %vm410, %v412, %v408
        %v414 = vmul.f32 %v388, %v413
        %s415 = scalar_lea.vmem [#allocation2], 3
        %416 = vst [vmem:[%s415] ss:$8 sm:$0xf] %v414
        %417 = vst [vmem:[%s415] ss:$8 sm:$0xf0] %v414
        %v418 = vadd.f32 %v388, 0.1
        %v419 = vrcp.pop %v418
        %v420 = vmul.f32 %v418, %v419
        %v421 = vsub.f32 1.0, %v420
        %v422 = vmul.f32 %v419, %v421
        %v423 = vadd.f32 %v419, %v422
        %vm424 = vweird.f32 %v418
        %vm425 = vweird.f32 %v419
        %vm426 = vmor %vm424, %vm425
        %v427 = vsel %vm426, %v419, %v423
        %v428 = vand.u32 2147483647, %v418
        %vm429 = vcmp.eq.f32.partialorder %v428, 8.507059e+37
        %v430 = vand.u32 %v418, 2147483648
        %v431 = vor.u32 1.1754944e-38, %v430
        %v432 = vsel %vm429, %v431, %v427
        %v433 = vmul.f32 %v389, %v432
        %s434 = scalar_lea.vmem [#allocation2], 4
        %435 = vst [vmem:[%s434] ss:$8 sm:$0xf] %v433
        %436 = vst [vmem:[%s434] ss:$8 sm:$0xf0] %v433
        %v437 = vld [vmem:[#allocation2] sm:$0xff]
        %v438 = vld [vmem:[#allocation2 + $0x8] sm:$0xff]
        %v439 = vld [vmem:[#allocation2 + $0x10] sm:$0xff]
        %v440 = vld [vmem:[#allocation2 + $0x18] sm:$0xff]
        %v441 = vld [vmem:[#allocation2 + $0x20] sm:$0xff]
        %v442 = vld [vmem:[#allocation2 + $0x28] sm:$0xff]
        %v443 = vld [vmem:[#allocation2 + $0x30] sm:$0xff]
        %v444 = vld [vmem:[#allocation2 + $0x38] sm:$0xff]
        %v445 = vld [vmem:[%s3] sm:$0xff]
        %v446 = vld [vmem:[%s3 + $0x8] sm:$0xff]
        %v447 = vld [vmem:[%s3 + $0x10] sm:$0xff]
        %v448 = vld [vmem:[%s3 + $0x18] sm:$0xff]
        %v449 = vld [vmem:[%s4] sm:$0xff]
        %v450 = vld [vmem:[%s4 + $0x8] sm:$0xff]
        %v451 = vld [vmem:[%s4 + $0x10] sm:$0xff]
        %v452 = vld [vmem:[%s4 + $0x18] sm:$0xff]
        %vm453 = vcmask 64512
        %v455 = vsel %vm453, %v445, 0
        %v458 = vsel %vm453, %v446, 0
        %v461 = vsel %vm453, %v447, 0
        %v464 = vsel %vm453, %v448, 0
        %466 = vmatpush.msra.mxu0 0.0
        %467 = vmatpush.msra.mxu0 0.0
        %468 = vmatpush.msra.mxu0 0.0
        %469 = vmatpush.msra.mxu0 0.0
        %470 = vmatpush.msra.mxu0 0.0
        %471 = vmatpush.msra.mxu0 0.0
        %472 = vmatpush.msra.mxu0 0.0
        %473 = vmatpush.msra.mxu0 0.0
        %474 = vmatpush.msra.mxu0 0.0
        %475 = vmatpush.msra.mxu0 0.0
        %476 = vmatpush.msra.mxu0 0.0
        %477 = vmatpush.msra.mxu0 0.0
        %478 = vmatpush.msra.mxu0 0.0
        %479 = vmatpush.msra.mxu0 0.0
        %480 = vmatpush.msra.mxu0 0.0
        %481 = vmatpush.msra.mxu0 %v437
        %482 = vmatmul.f32.gmra.mxu0 %v455
        %v483 = vpop.f32.mrf.mxu0
        %v484 = vadd.f32 0.0, %v483
        %485 = vmatmul.f32.gmra.mxu0 %v458
        %v486 = vpop.f32.mrf.mxu0
        %v487 = vadd.f32 0.0, %v486
        %488 = vmatmul.f32.gmra.mxu0 %v461
        %v489 = vpop.f32.mrf.mxu0
        %v490 = vadd.f32 0.0, %v489
        %491 = vmatmul.f32.gmra.mxu0 %v464
        %v492 = vpop.f32.mrf.mxu0
        %v493 = vadd.f32 0.0, %v492
        %494 = vdwg.mxu0
        %495 = vmatpush.msra.mxu0 0.0
        %496 = vmatpush.msra.mxu0 0.0
        %497 = vmatpush.msra.mxu0 0.0
        %498 = vmatpush.msra.mxu0 0.0
        %499 = vmatpush.msra.mxu0 0.0
        %500 = vmatpush.msra.mxu0 0.0
        %501 = vmatpush.msra.mxu0 0.0
        %502 = vmatpush.msra.mxu0 0.0
        %503 = vmatpush.msra.mxu0 0.0
        %504 = vmatpush.msra.mxu0 0.0
        %505 = vmatpush.msra.mxu0 0.0
        %506 = vmatpush.msra.mxu0 0.0
        %507 = vmatpush.msra.mxu0 0.0
        %508 = vmatpush.msra.mxu0 0.0
        %509 = vmatpush.msra.mxu0 0.0
        %510 = vmatpush.msra.mxu0 %v438
        %511 = vmatmul.f32.gmra.mxu0 %v455
        %v512 = vpop.f32.mrf.mxu0
        %v513 = vadd.f32 0.0, %v512
        %514 = vmatmul.f32.gmra.mxu0 %v458
        %v515 = vpop.f32.mrf.mxu0
        %v516 = vadd.f32 0.0, %v515
        %517 = vmatmul.f32.gmra.mxu0 %v461
        %v518 = vpop.f32.mrf.mxu0
        %v519 = vadd.f32 0.0, %v518
        %520 = vmatmul.f32.gmra.mxu0 %v464
        %v521 = vpop.f32.mrf.mxu0
        %v522 = vadd.f32 0.0, %v521
        %523 = vdwg.mxu0
        %524 = vmatpush.msra.mxu0 0.0
        %525 = vmatpush.msra.mxu0 0.0
        %526 = vmatpush.msra.mxu0 0.0
        %527 = vmatpush.msra.mxu0 0.0
        %528 = vmatpush.msra.mxu0 0.0
        %529 = vmatpush.msra.mxu0 0.0
        %530 = vmatpush.msra.mxu0 0.0
        %531 = vmatpush.msra.mxu0 0.0
        %532 = vmatpush.msra.mxu0 0.0
        %533 = vmatpush.msra.mxu0 0.0
        %534 = vmatpush.msra.mxu0 0.0
        %535 = vmatpush.msra.mxu0 0.0
        %536 = vmatpush.msra.mxu0 0.0
        %537 = vmatpush.msra.mxu0 0.0
        %538 = vmatpush.msra.mxu0 0.0
        %539 = vmatpush.msra.mxu0 %v439
        %540 = vmatmul.f32.gmra.mxu0 %v455
        %v541 = vpop.f32.mrf.mxu0
        %v542 = vadd.f32 0.0, %v541
        %543 = vmatmul.f32.gmra.mxu0 %v458
        %v544 = vpop.f32.mrf.mxu0
        %v545 = vadd.f32 0.0, %v544
        %546 = vmatmul.f32.gmra.mxu0 %v461
        %v547 = vpop.f32.mrf.mxu0
        %v548 = vadd.f32 0.0, %v547
        %549 = vmatmul.f32.gmra.mxu0 %v464
        %v550 = vpop.f32.mrf.mxu0
        %v551 = vadd.f32 0.0, %v550
        %552 = vdwg.mxu0
        %553 = vmatpush.msra.mxu0 0.0
        %554 = vmatpush.msra.mxu0 0.0
        %555 = vmatpush.msra.mxu0 0.0
        %556 = vmatpush.msra.mxu0 0.0
        %557 = vmatpush.msra.mxu0 0.0
        %558 = vmatpush.msra.mxu0 0.0
        %559 = vmatpush.msra.mxu0 0.0
        %560 = vmatpush.msra.mxu0 0.0
        %561 = vmatpush.msra.mxu0 0.0
        %562 = vmatpush.msra.mxu0 0.0
        %563 = vmatpush.msra.mxu0 0.0
        %564 = vmatpush.msra.mxu0 0.0
        %565 = vmatpush.msra.mxu0 0.0
        %566 = vmatpush.msra.mxu0 0.0
        %567 = vmatpush.msra.mxu0 0.0
        %568 = vmatpush.msra.mxu0 %v440
        %569 = vmatmul.f32.gmra.mxu0 %v455
        %v570 = vpop.f32.mrf.mxu0
        %v571 = vadd.f32 0.0, %v570
        %572 = vmatmul.f32.gmra.mxu0 %v458
        %v573 = vpop.f32.mrf.mxu0
        %v574 = vadd.f32 0.0, %v573
        %575 = vmatmul.f32.gmra.mxu0 %v461
        %v576 = vpop.f32.mrf.mxu0
        %v577 = vadd.f32 0.0, %v576
        %578 = vmatmul.f32.gmra.mxu0 %v464
        %v579 = vpop.f32.mrf.mxu0
        %v580 = vadd.f32 0.0, %v579
        %581 = vdwg.mxu0
        %582 = vmatpush.msra.mxu0 0.0
        %583 = vmatpush.msra.mxu0 0.0
        %584 = vmatpush.msra.mxu0 0.0
        %585 = vmatpush.msra.mxu0 0.0
        %586 = vmatpush.msra.mxu0 0.0
        %587 = vmatpush.msra.mxu0 0.0
        %588 = vmatpush.msra.mxu0 0.0
        %589 = vmatpush.msra.mxu0 0.0
        %590 = vmatpush.msra.mxu0 0.0
        %591 = vmatpush.msra.mxu0 0.0
        %592 = vmatpush.msra.mxu0 0.0
        %593 = vmatpush.msra.mxu0 0.0
        %594 = vmatpush.msra.mxu0 0.0
        %595 = vmatpush.msra.mxu0 0.0
        %596 = vmatpush.msra.mxu0 0.0
        %597 = vmatpush.msra.mxu0 %v441
        %598 = vmatmul.f32.gmra.mxu0 %v455
        %v599 = vpop.f32.mrf.mxu0
        %v600 = vadd.f32 0.0, %v599
        %601 = vmatmul.f32.gmra.mxu0 %v458
        %v602 = vpop.f32.mrf.mxu0
        %v603 = vadd.f32 0.0, %v602
        %604 = vmatmul.f32.gmra.mxu0 %v461
        %v605 = vpop.f32.mrf.mxu0
        %v606 = vadd.f32 0.0, %v605
        %607 = vmatmul.f32.gmra.mxu0 %v464
        %v608 = vpop.f32.mrf.mxu0
        %v609 = vadd.f32 0.0, %v608
        %610 = vdwg.mxu0
        %611 = vmatpush.msra.mxu0 0.0
        %612 = vmatpush.msra.mxu0 0.0
        %613 = vmatpush.msra.mxu0 0.0
        %614 = vmatpush.msra.mxu0 0.0
        %615 = vmatpush.msra.mxu0 0.0
        %616 = vmatpush.msra.mxu0 0.0
        %617 = vmatpush.msra.mxu0 0.0
        %618 = vmatpush.msra.mxu0 0.0
        %619 = vmatpush.msra.mxu0 0.0
        %620 = vmatpush.msra.mxu0 0.0
        %621 = vmatpush.msra.mxu0 0.0
        %622 = vmatpush.msra.mxu0 0.0
        %623 = vmatpush.msra.mxu0 0.0
        %624 = vmatpush.msra.mxu0 0.0
        %625 = vmatpush.msra.mxu0 0.0
        %626 = vmatpush.msra.mxu0 %v442
        %627 = vmatmul.f32.gmra.mxu0 %v455
        %v628 = vpop.f32.mrf.mxu0
        %v629 = vadd.f32 0.0, %v628
        %630 = vmatmul.f32.gmra.mxu0 %v458
        %v631 = vpop.f32.mrf.mxu0
        %v632 = vadd.f32 0.0, %v631
        %633 = vmatmul.f32.gmra.mxu0 %v461
        %v634 = vpop.f32.mrf.mxu0
        %v635 = vadd.f32 0.0, %v634
        %636 = vmatmul.f32.gmra.mxu0 %v464
        %v637 = vpop.f32.mrf.mxu0
        %v638 = vadd.f32 0.0, %v637
        %639 = vdwg.mxu0
        %640 = vmatpush.msra.mxu0 0.0
        %641 = vmatpush.msra.mxu0 0.0
        %642 = vmatpush.msra.mxu0 0.0
        %643 = vmatpush.msra.mxu0 0.0
        %644 = vmatpush.msra.mxu0 0.0
        %645 = vmatpush.msra.mxu0 0.0
        %646 = vmatpush.msra.mxu0 0.0
        %647 = vmatpush.msra.mxu0 0.0
        %648 = vmatpush.msra.mxu0 0.0
        %649 = vmatpush.msra.mxu0 0.0
        %650 = vmatpush.msra.mxu0 0.0
        %651 = vmatpush.msra.mxu0 0.0
        %652 = vmatpush.msra.mxu0 0.0
        %653 = vmatpush.msra.mxu0 0.0
        %654 = vmatpush.msra.mxu0 0.0
        %655 = vmatpush.msra.mxu0 %v443
        %656 = vmatmul.f32.gmra.mxu0 %v455
        %v657 = vpop.f32.mrf.mxu0
        %v658 = vadd.f32 0.0, %v657
        %659 = vmatmul.f32.gmra.mxu0 %v458
        %v660 = vpop.f32.mrf.mxu0
        %v661 = vadd.f32 0.0, %v660
        %662 = vmatmul.f32.gmra.mxu0 %v461
        %v663 = vpop.f32.mrf.mxu0
        %v664 = vadd.f32 0.0, %v663
        %665 = vmatmul.f32.gmra.mxu0 %v464
        %v666 = vpop.f32.mrf.mxu0
        %v667 = vadd.f32 0.0, %v666
        %668 = vdwg.mxu0
        %669 = vmatpush.msra.mxu0 0.0
        %670 = vmatpush.msra.mxu0 0.0
        %671 = vmatpush.msra.mxu0 0.0
        %672 = vmatpush.msra.mxu0 0.0
        %673 = vmatpush.msra.mxu0 0.0
        %674 = vmatpush.msra.mxu0 0.0
        %675 = vmatpush.msra.mxu0 0.0
        %676 = vmatpush.msra.mxu0 0.0
        %677 = vmatpush.msra.mxu0 0.0
        %678 = vmatpush.msra.mxu0 0.0
        %679 = vmatpush.msra.mxu0 0.0
        %680 = vmatpush.msra.mxu0 0.0
        %681 = vmatpush.msra.mxu0 0.0
        %682 = vmatpush.msra.mxu0 0.0
        %683 = vmatpush.msra.mxu0 0.0
        %684 = vmatpush.msra.mxu0 %v444
        %685 = vmatmul.f32.gmra.mxu0 %v455
        %v686 = vpop.f32.mrf.mxu0
        %v687 = vadd.f32 0.0, %v686
        %688 = vmatmul.f32.gmra.mxu0 %v458
        %v689 = vpop.f32.mrf.mxu0
        %v690 = vadd.f32 0.0, %v689
        %691 = vmatmul.f32.gmra.mxu0 %v461
        %v692 = vpop.f32.mrf.mxu0
        %v693 = vadd.f32 0.0, %v692
        %694 = vmatmul.f32.gmra.mxu0 %v464
        %v695 = vpop.f32.mrf.mxu0
        %v696 = vadd.f32 0.0, %v695
        %697 = vdwg.mxu0
        %v698 = vmul.f32 %v484, 0.2
        %v699 = vmul.f32 %v513, 0.2
        %v700 = vmul.f32 %v542, 0.2
        %v701 = vmul.f32 %v571, 0.2
        %v702 = vmul.f32 %v600, 0.2
        %v703 = vmul.f32 %v629, 0.2
        %v704 = vmul.f32 %v658, 0.2
        %v705 = vmul.f32 %v687, 0.2
        %v706 = vmul.f32 %v487, 0.2
        %v707 = vmul.f32 %v516, 0.2
        %v708 = vmul.f32 %v545, 0.2
        %v709 = vmul.f32 %v574, 0.2
        %v710 = vmul.f32 %v603, 0.2
        %v711 = vmul.f32 %v632, 0.2
        %v712 = vmul.f32 %v661, 0.2
        %v713 = vmul.f32 %v690, 0.2
        %v714 = vmul.f32 %v490, 0.2
        %v715 = vmul.f32 %v519, 0.2
        %v716 = vmul.f32 %v548, 0.2
        %v717 = vmul.f32 %v577, 0.2
        %v718 = vmul.f32 %v606, 0.2
        %v719 = vmul.f32 %v635, 0.2
        %v720 = vmul.f32 %v664, 0.2
        %v721 = vmul.f32 %v693, 0.2
        %v722 = vmul.f32 %v493, 0.2
        %v723 = vmul.f32 %v522, 0.2
        %v724 = vmul.f32 %v551, 0.2
        %v725 = vmul.f32 %v580, 0.2
        %v726 = vmul.f32 %v609, 0.2
        %v727 = vmul.f32 %v638, 0.2
        %v728 = vmul.f32 %v667, 0.2
        %v729 = vmul.f32 %v696, 0.2
        %v730 = vmax.f32 %v484, %v698
        %v731 = vmax.f32 %v513, %v699
        %v732 = vmax.f32 %v542, %v700
        %v733 = vmax.f32 %v571, %v701
        %v734 = vmax.f32 %v600, %v702
        %v735 = vmax.f32 %v629, %v703
        %v736 = vmax.f32 %v658, %v704
        %v737 = vmax.f32 %v687, %v705
        %v738 = vmax.f32 %v487, %v706
        %v739 = vmax.f32 %v516, %v707
        %v740 = vmax.f32 %v545, %v708
        %v741 = vmax.f32 %v574, %v709
        %v742 = vmax.f32 %v603, %v710
        %v743 = vmax.f32 %v632, %v711
        %v744 = vmax.f32 %v661, %v712
        %v745 = vmax.f32 %v690, %v713
        %v746 = vmax.f32 %v490, %v714
        %v747 = vmax.f32 %v519, %v715
        %v748 = vmax.f32 %v548, %v716
        %v749 = vmax.f32 %v577, %v717
        %v750 = vmax.f32 %v606, %v718
        %v751 = vmax.f32 %v635, %v719
        %v752 = vmax.f32 %v664, %v720
        %v753 = vmax.f32 %v693, %v721
        %v754 = vmax.f32 %v493, %v722
        %v755 = vmax.f32 %v522, %v723
        %v756 = vmax.f32 %v551, %v724
        %v757 = vmax.f32 %v580, %v725
        %v758 = vmax.f32 %v609, %v726
        %v759 = vmax.f32 %v638, %v727
        %v760 = vmax.f32 %v667, %v728
        %v761 = vmax.f32 %v696, %v729
        %v762 = vld [vmem:[%s5] sm:$0xff]
        %v763 = vld [vmem:[%s5 + $0x8] sm:$0xff]
        %v764 = vld [vmem:[%s5 + $0x10] sm:$0xff]
        %v765 = vld [vmem:[%s5 + $0x18] sm:$0xff]
        %767 = vset.pattern.permute.xlu0 0
        %768 = vperm.xlu0 %767, %v762
        %v769 = vpop.permute.xlu0 %768
        %772 = vset.pattern.permute.xlu0 0
        %773 = vperm.xlu0 %772, %v763
        %v774 = vpop.permute.xlu0 %773
        %777 = vset.pattern.permute.xlu0 0
        %778 = vperm.xlu0 %777, %v764
        %v779 = vpop.permute.xlu0 %778
        %782 = vset.pattern.permute.xlu0 0
        %783 = vperm.xlu0 %782, %v765
        %v784 = vpop.permute.xlu0 %783
        %vm786 = vcmask 261120
        %v788 = vsel %vm786, %v449, 0
        %v791 = vsel %vm786, %v450, 0
        %v794 = vsel %vm786, %v451, 0
        %v797 = vsel %vm786, %v452, 0
        %799 = vmatpush.msra.mxu0 0.0
        %800 = vmatpush.msra.mxu0 0.0
        %801 = vmatpush.msra.mxu0 0.0
        %802 = vmatpush.msra.mxu0 0.0
        %803 = vmatpush.msra.mxu0 0.0
        %804 = vmatpush.msra.mxu0 0.0
        %805 = vmatpush.msra.mxu0 0.0
        %806 = vmatpush.msra.mxu0 0.0
        %807 = vmatpush.msra.mxu0 0.0
        %808 = vmatpush.msra.mxu0 0.0
        %809 = vmatpush.msra.mxu0 0.0
        %810 = vmatpush.msra.mxu0 0.0
        %811 = vmatpush.msra.mxu0 %v754
        %812 = vmatpush.msra.mxu0 %v746
        %813 = vmatpush.msra.mxu0 %v738
        %814 = vmatpush.msra.mxu0 %v730
        %815 = vmatmul.f32.gmra.mxu0 %v788
        %v816 = vpop.f32.mrf.mxu0
        %v817 = vadd.f32 %v769, %v816
        %818 = vmatmul.f32.gmra.mxu0 %v791
        %v819 = vpop.f32.mrf.mxu0
        %v820 = vadd.f32 %v774, %v819
        %821 = vmatmul.f32.gmra.mxu0 %v794
        %v822 = vpop.f32.mrf.mxu0
        %v823 = vadd.f32 %v779, %v822
        %824 = vmatmul.f32.gmra.mxu0 %v797
        %v825 = vpop.f32.mrf.mxu0
        %v826 = vadd.f32 %v784, %v825
        %827 = vdwg.mxu0
        %828 = vmatpush.msra.mxu0 0.0
        %829 = vmatpush.msra.mxu0 0.0
        %830 = vmatpush.msra.mxu0 0.0
        %831 = vmatpush.msra.mxu0 0.0
        %832 = vmatpush.msra.mxu0 0.0
        %833 = vmatpush.msra.mxu0 0.0
        %834 = vmatpush.msra.mxu0 0.0
        %835 = vmatpush.msra.mxu0 0.0
        %836 = vmatpush.msra.mxu0 0.0
        %837 = vmatpush.msra.mxu0 0.0
        %838 = vmatpush.msra.mxu0 0.0
        %839 = vmatpush.msra.mxu0 0.0
        %840 = vmatpush.msra.mxu0 %v755
        %841 = vmatpush.msra.mxu0 %v747
        %842 = vmatpush.msra.mxu0 %v739
        %843 = vmatpush.msra.mxu0 %v731
        %844 = vmatmul.f32.gmra.mxu0 %v788
        %v845 = vpop.f32.mrf.mxu0
        %v846 = vadd.f32 %v769, %v845
        %847 = vmatmul.f32.gmra.mxu0 %v791
        %v848 = vpop.f32.mrf.mxu0
        %v849 = vadd.f32 %v774, %v848
        %850 = vmatmul.f32.gmra.mxu0 %v794
        %v851 = vpop.f32.mrf.mxu0
        %v852 = vadd.f32 %v779, %v851
        %853 = vmatmul.f32.gmra.mxu0 %v797
        %v854 = vpop.f32.mrf.mxu0
        %v855 = vadd.f32 %v784, %v854
        %856 = vdwg.mxu0
        %857 = vmatpush.msra.mxu0 0.0
        %858 = vmatpush.msra.mxu0 0.0
        %859 = vmatpush.msra.mxu0 0.0
        %860 = vmatpush.msra.mxu0 0.0
        %861 = vmatpush.msra.mxu0 0.0
        %862 = vmatpush.msra.mxu0 0.0
        %863 = vmatpush.msra.mxu0 0.0
        %864 = vmatpush.msra.mxu0 0.0
        %865 = vmatpush.msra.mxu0 0.0
        %866 = vmatpush.msra.mxu0 0.0
        %867 = vmatpush.msra.mxu0 0.0
        %868 = vmatpush.msra.mxu0 0.0
        %869 = vmatpush.msra.mxu0 %v756
        %870 = vmatpush.msra.mxu0 %v748
        %871 = vmatpush.msra.mxu0 %v740
        %872 = vmatpush.msra.mxu0 %v732
        %873 = vmatmul.f32.gmra.mxu0 %v788
        %v874 = vpop.f32.mrf.mxu0
        %v875 = vadd.f32 %v769, %v874
        %876 = vmatmul.f32.gmra.mxu0 %v791
        %v877 = vpop.f32.mrf.mxu0
        %v878 = vadd.f32 %v774, %v877
        %879 = vmatmul.f32.gmra.mxu0 %v794
        %v880 = vpop.f32.mrf.mxu0
        %v881 = vadd.f32 %v779, %v880
        %882 = vmatmul.f32.gmra.mxu0 %v797
        %v883 = vpop.f32.mrf.mxu0
        %v884 = vadd.f32 %v784, %v883
        %885 = vdwg.mxu0
        %886 = vmatpush.msra.mxu0 0.0
        %887 = vmatpush.msra.mxu0 0.0
        %888 = vmatpush.msra.mxu0 0.0
        %889 = vmatpush.msra.mxu0 0.0
        %890 = vmatpush.msra.mxu0 0.0
        %891 = vmatpush.msra.mxu0 0.0
        %892 = vmatpush.msra.mxu0 0.0
        %893 = vmatpush.msra.mxu0 0.0
        %894 = vmatpush.msra.mxu0 0.0
        %895 = vmatpush.msra.mxu0 0.0
        %896 = vmatpush.msra.mxu0 0.0
        %897 = vmatpush.msra.mxu0 0.0
        %898 = vmatpush.msra.mxu0 %v757
        %899 = vmatpush.msra.mxu0 %v749
        %900 = vmatpush.msra.mxu0 %v741
        %901 = vmatpush.msra.mxu0 %v733
        %902 = vmatmul.f32.gmra.mxu0 %v788
        %v903 = vpop.f32.mrf.mxu0
        %v904 = vadd.f32 %v769, %v903
        %905 = vmatmul.f32.gmra.mxu0 %v791
        %v906 = vpop.f32.mrf.mxu0
        %v907 = vadd.f32 %v774, %v906
        %908 = vmatmul.f32.gmra.mxu0 %v794
        %v909 = vpop.f32.mrf.mxu0
        %v910 = vadd.f32 %v779, %v909
        %911 = vmatmul.f32.gmra.mxu0 %v797
        %v912 = vpop.f32.mrf.mxu0
        %v913 = vadd.f32 %v784, %v912
        %914 = vdwg.mxu0
        %915 = vmatpush.msra.mxu0 0.0
        %916 = vmatpush.msra.mxu0 0.0
        %917 = vmatpush.msra.mxu0 0.0
        %918 = vmatpush.msra.mxu0 0.0
        %919 = vmatpush.msra.mxu0 0.0
        %920 = vmatpush.msra.mxu0 0.0
        %921 = vmatpush.msra.mxu0 0.0
        %922 = vmatpush.msra.mxu0 0.0
        %923 = vmatpush.msra.mxu0 0.0
        %924 = vmatpush.msra.mxu0 0.0
        %925 = vmatpush.msra.mxu0 0.0
        %926 = vmatpush.msra.mxu0 0.0
        %927 = vmatpush.msra.mxu0 %v758
        %928 = vmatpush.msra.mxu0 %v750
        %929 = vmatpush.msra.mxu0 %v742
        %930 = vmatpush.msra.mxu0 %v734
        %931 = vmatmul.f32.gmra.mxu0 %v788
        %v932 = vpop.f32.mrf.mxu0
        %v933 = vadd.f32 %v769, %v932
        %934 = vmatmul.f32.gmra.mxu0 %v791
        %v935 = vpop.f32.mrf.mxu0
        %v936 = vadd.f32 %v774, %v935
        %937 = vmatmul.f32.gmra.mxu0 %v794
        %v938 = vpop.f32.mrf.mxu0
        %v939 = vadd.f32 %v779, %v938
        %940 = vmatmul.f32.gmra.mxu0 %v797
        %v941 = vpop.f32.mrf.mxu0
        %v942 = vadd.f32 %v784, %v941
        %943 = vdwg.mxu0
        %944 = vmatpush.msra.mxu0 0.0
        %945 = vmatpush.msra.mxu0 0.0
        %946 = vmatpush.msra.mxu0 0.0
        %947 = vmatpush.msra.mxu0 0.0
        %948 = vmatpush.msra.mxu0 0.0
        %949 = vmatpush.msra.mxu0 0.0
        %950 = vmatpush.msra.mxu0 0.0
        %951 = vmatpush.msra.mxu0 0.0
        %952 = vmatpush.msra.mxu0 0.0
        %953 = vmatpush.msra.mxu0 0.0
        %954 = vmatpush.msra.mxu0 0.0
        %955 = vmatpush.msra.mxu0 0.0
        %956 = vmatpush.msra.mxu0 %v759
        %957 = vmatpush.msra.mxu0 %v751
        %958 = vmatpush.msra.mxu0 %v743
        %959 = vmatpush.msra.mxu0 %v735
        %960 = vmatmul.f32.gmra.mxu0 %v788
        %v961 = vpop.f32.mrf.mxu0
        %v962 = vadd.f32 %v769, %v961
        %963 = vmatmul.f32.gmra.mxu0 %v791
        %v964 = vpop.f32.mrf.mxu0
        %v965 = vadd.f32 %v774, %v964
        %966 = vmatmul.f32.gmra.mxu0 %v794
        %v967 = vpop.f32.mrf.mxu0
        %v968 = vadd.f32 %v779, %v967
        %969 = vmatmul.f32.gmra.mxu0 %v797
        %v970 = vpop.f32.mrf.mxu0
        %v971 = vadd.f32 %v784, %v970
        %972 = vdwg.mxu0
        %973 = vmatpush.msra.mxu0 0.0
        %974 = vmatpush.msra.mxu0 0.0
        %975 = vmatpush.msra.mxu0 0.0
        %976 = vmatpush.msra.mxu0 0.0
        %977 = vmatpush.msra.mxu0 0.0
        %978 = vmatpush.msra.mxu0 0.0
        %979 = vmatpush.msra.mxu0 0.0
        %980 = vmatpush.msra.mxu0 0.0
        %981 = vmatpush.msra.mxu0 0.0
        %982 = vmatpush.msra.mxu0 0.0
        %983 = vmatpush.msra.mxu0 0.0
        %984 = vmatpush.msra.mxu0 0.0
        %985 = vmatpush.msra.mxu0 %v760
        %986 = vmatpush.msra.mxu0 %v752
        %987 = vmatpush.msra.mxu0 %v744
        %988 = vmatpush.msra.mxu0 %v736
        %989 = vmatmul.f32.gmra.mxu0 %v788
        %v990 = vpop.f32.mrf.mxu0
        %v991 = vadd.f32 %v769, %v990
        %992 = vmatmul.f32.gmra.mxu0 %v791
        %v993 = vpop.f32.mrf.mxu0
        %v994 = vadd.f32 %v774, %v993
        %995 = vmatmul.f32.gmra.mxu0 %v794
        %v996 = vpop.f32.mrf.mxu0
        %v997 = vadd.f32 %v779, %v996
        %998 = vmatmul.f32.gmra.mxu0 %v797
        %v999 = vpop.f32.mrf.mxu0
        %v1000 = vadd.f32 %v784, %v999
        %1001 = vdwg.mxu0
        %1002 = vmatpush.msra.mxu0 0.0
        %1003 = vmatpush.msra.mxu0 0.0
        %1004 = vmatpush.msra.mxu0 0.0
        %1005 = vmatpush.msra.mxu0 0.0
        %1006 = vmatpush.msra.mxu0 0.0
        %1007 = vmatpush.msra.mxu0 0.0
        %1008 = vmatpush.msra.mxu0 0.0
        %1009 = vmatpush.msra.mxu0 0.0
        %1010 = vmatpush.msra.mxu0 0.0
        %1011 = vmatpush.msra.mxu0 0.0
        %1012 = vmatpush.msra.mxu0 0.0
        %1013 = vmatpush.msra.mxu0 0.0
        %1014 = vmatpush.msra.mxu0 %v761
        %1015 = vmatpush.msra.mxu0 %v753
        %1016 = vmatpush.msra.mxu0 %v745
        %1017 = vmatpush.msra.mxu0 %v737
        %1018 = vmatmul.f32.gmra.mxu0 %v788
        %v1019 = vpop.f32.mrf.mxu0
        %v1020 = vadd.f32 %v769, %v1019
        %1021 = vmatmul.f32.gmra.mxu0 %v791
        %v1022 = vpop.f32.mrf.mxu0
        %v1023 = vadd.f32 %v774, %v1022
        %1024 = vmatmul.f32.gmra.mxu0 %v794
        %v1025 = vpop.f32.mrf.mxu0
        %v1026 = vadd.f32 %v779, %v1025
        %1027 = vmatmul.f32.gmra.mxu0 %v797
        %v1028 = vpop.f32.mrf.mxu0
        %v1029 = vadd.f32 %v784, %v1028
        %1030 = vdwg.mxu0
        %v1031 = vmul.f32 %v817, 0.2
        %v1032 = vmul.f32 %v846, 0.2
        %v1033 = vmul.f32 %v875, 0.2
        %v1034 = vmul.f32 %v904, 0.2
        %v1035 = vmul.f32 %v933, 0.2
        %v1036 = vmul.f32 %v962, 0.2
        %v1037 = vmul.f32 %v991, 0.2
        %v1038 = vmul.f32 %v1020, 0.2
        %v1039 = vmul.f32 %v820, 0.2
        %v1040 = vmul.f32 %v849, 0.2
        %v1041 = vmul.f32 %v878, 0.2
        %v1042 = vmul.f32 %v907, 0.2
        %v1043 = vmul.f32 %v936, 0.2
        %v1044 = vmul.f32 %v965, 0.2
        %v1045 = vmul.f32 %v994, 0.2
        %v1046 = vmul.f32 %v1023, 0.2
        %v1047 = vmul.f32 %v823, 0.2
        %v1048 = vmul.f32 %v852, 0.2
        %v1049 = vmul.f32 %v881, 0.2
        %v1050 = vmul.f32 %v910, 0.2
        %v1051 = vmul.f32 %v939, 0.2
        %v1052 = vmul.f32 %v968, 0.2
        %v1053 = vmul.f32 %v997, 0.2
        %v1054 = vmul.f32 %v1026, 0.2
        %v1055 = vmul.f32 %v826, 0.2
        %v1056 = vmul.f32 %v855, 0.2
        %v1057 = vmul.f32 %v884, 0.2
        %v1058 = vmul.f32 %v913, 0.2
        %v1059 = vmul.f32 %v942, 0.2
        %v1060 = vmul.f32 %v971, 0.2
        %v1061 = vmul.f32 %v1000, 0.2
        %v1062 = vmul.f32 %v1029, 0.2
        %v1063 = vmax.f32 %v817, %v1031
        %v1064 = vmax.f32 %v846, %v1032
        %v1065 = vmax.f32 %v875, %v1033
        %v1066 = vmax.f32 %v904, %v1034
        %v1067 = vmax.f32 %v933, %v1035
        %v1068 = vmax.f32 %v962, %v1036
        %v1069 = vmax.f32 %v991, %v1037
        %v1070 = vmax.f32 %v1020, %v1038
        %v1071 = vmax.f32 %v820, %v1039
        %v1072 = vmax.f32 %v849, %v1040
        %v1073 = vmax.f32 %v878, %v1041
        %v1074 = vmax.f32 %v907, %v1042
        %v1075 = vmax.f32 %v936, %v1043
        %v1076 = vmax.f32 %v965, %v1044
        %v1077 = vmax.f32 %v994, %v1045
        %v1078 = vmax.f32 %v1023, %v1046
        %v1079 = vmax.f32 %v823, %v1047
        %v1080 = vmax.f32 %v852, %v1048
        %v1081 = vmax.f32 %v881, %v1049
        %v1082 = vmax.f32 %v910, %v1050
        %v1083 = vmax.f32 %v939, %v1051
        %v1084 = vmax.f32 %v968, %v1052
        %v1085 = vmax.f32 %v997, %v1053
        %v1086 = vmax.f32 %v1026, %v1054
        %v1087 = vmax.f32 %v826, %v1055
        %v1088 = vmax.f32 %v855, %v1056
        %v1089 = vmax.f32 %v884, %v1057
        %v1090 = vmax.f32 %v913, %v1058
        %v1091 = vmax.f32 %v942, %v1059
        %v1092 = vmax.f32 %v971, %v1060
        %v1093 = vmax.f32 %v1000, %v1061
        %v1094 = vmax.f32 %v1029, %v1062
        %v1095 = vld [vmem:[%s6] sm:$0xff]
        %v1096 = vld [vmem:[%s6 + $0x8] sm:$0xff]
        %v1097 = vld [vmem:[%s6 + $0x10] sm:$0xff]
        %v1098 = vld [vmem:[%s6 + $0x18] sm:$0xff]
        %1100 = vset.pattern.permute.xlu0 0
        %1101 = vperm.xlu0 %1100, %v1095
        %v1102 = vpop.permute.xlu0 %1101
        %1105 = vset.pattern.permute.xlu0 0
        %1106 = vperm.xlu0 %1105, %v1096
        %v1107 = vpop.permute.xlu0 %1106
        %1110 = vset.pattern.permute.xlu0 0
        %1111 = vperm.xlu0 %1110, %v1097
        %v1112 = vpop.permute.xlu0 %1111
        %1115 = vset.pattern.permute.xlu0 0
        %1116 = vperm.xlu0 %1115, %v1098
        %v1117 = vpop.permute.xlu0 %1116
        %v1119 = vmul.f32 %v1102, %v1063
        %v1120 = vmul.f32 %v1102, %v1064
        %v1121 = vmul.f32 %v1102, %v1065
        %v1122 = vmul.f32 %v1102, %v1066
        %v1123 = vmul.f32 %v1102, %v1067
        %v1124 = vmul.f32 %v1102, %v1068
        %v1125 = vmul.f32 %v1102, %v1069
        %v1126 = vmul.f32 %v1102, %v1070
        %v1127 = vmul.f32 %v1107, %v1071
        %v1128 = vmul.f32 %v1107, %v1072
        %v1129 = vmul.f32 %v1107, %v1073
        %v1130 = vmul.f32 %v1107, %v1074
        %v1131 = vmul.f32 %v1107, %v1075
        %v1132 = vmul.f32 %v1107, %v1076
        %v1133 = vmul.f32 %v1107, %v1077
        %v1134 = vmul.f32 %v1107, %v1078
        %v1135 = vmul.f32 %v1112, %v1079
        %v1136 = vmul.f32 %v1112, %v1080
        %v1137 = vmul.f32 %v1112, %v1081
        %v1138 = vmul.f32 %v1112, %v1082
        %v1139 = vmul.f32 %v1112, %v1083
        %v1140 = vmul.f32 %v1112, %v1084
        %v1141 = vmul.f32 %v1112, %v1085
        %v1142 = vmul.f32 %v1112, %v1086
        %v1143 = vmul.f32 %v1117, %v1087
        %v1144 = vmul.f32 %v1117, %v1088
        %v1145 = vmul.f32 %v1117, %v1089
        %v1146 = vmul.f32 %v1117, %v1090
        %v1147 = vmul.f32 %v1117, %v1091
        %v1148 = vmul.f32 %v1117, %v1092
        %v1149 = vmul.f32 %v1117, %v1093
        %v1150 = vmul.f32 %v1117, %v1094
        %v1151 = vadd.f32 %v1119, %v1127
        %v1152 = vadd.f32 %v1151, %v1135
        %v1153 = vadd.f32 %v1152, %v1143
        %v1154 = vrot.slane %v1153, 4
        %v1155 = vadd.f32 %v1153, %v1154
        %v1156 = vrot.slane %v1155, 2
        %v1157 = vadd.f32 %v1155, %v1156
        %v1158 = vrot.slane %v1157, 1
        %v1159 = vadd.f32 %v1157, %v1158
        %v1160 = vadd.f32 %v1120, %v1128
        %v1161 = vadd.f32 %v1160, %v1136
        %v1162 = vadd.f32 %v1161, %v1144
        %v1163 = vrot.slane %v1162, 4
        %v1164 = vadd.f32 %v1162, %v1163
        %v1165 = vrot.slane %v1164, 2
        %v1166 = vadd.f32 %v1164, %v1165
        %v1167 = vrot.slane %v1166, 1
        %v1168 = vadd.f32 %v1166, %v1167
        %v1169 = vadd.f32 %v1121, %v1129
        %v1170 = vadd.f32 %v1169, %v1137
        %v1171 = vadd.f32 %v1170, %v1145
        %v1172 = vrot.slane %v1171, 4
        %v1173 = vadd.f32 %v1171, %v1172
        %v1174 = vrot.slane %v1173, 2
        %v1175 = vadd.f32 %v1173, %v1174
        %v1176 = vrot.slane %v1175, 1
        %v1177 = vadd.f32 %v1175, %v1176
        %v1178 = vadd.f32 %v1122, %v1130
        %v1179 = vadd.f32 %v1178, %v1138
        %v1180 = vadd.f32 %v1179, %v1146
        %v1181 = vrot.slane %v1180, 4
        %v1182 = vadd.f32 %v1180, %v1181
        %v1183 = vrot.slane %v1182, 2
        %v1184 = vadd.f32 %v1182, %v1183
        %v1185 = vrot.slane %v1184, 1
        %v1186 = vadd.f32 %v1184, %v1185
        %v1187 = vadd.f32 %v1123, %v1131
        %v1188 = vadd.f32 %v1187, %v1139
        %v1189 = vadd.f32 %v1188, %v1147
        %v1190 = vrot.slane %v1189, 4
        %v1191 = vadd.f32 %v1189, %v1190
        %v1192 = vrot.slane %v1191, 2
        %v1193 = vadd.f32 %v1191, %v1192
        %v1194 = vrot.slane %v1193, 1
        %v1195 = vadd.f32 %v1193, %v1194
        %v1196 = vadd.f32 %v1124, %v1132
        %v1197 = vadd.f32 %v1196, %v1140
        %v1198 = vadd.f32 %v1197, %v1148
        %v1199 = vrot.slane %v1198, 4
        %v1200 = vadd.f32 %v1198, %v1199
        %v1201 = vrot.slane %v1200, 2
        %v1202 = vadd.f32 %v1200, %v1201
        %v1203 = vrot.slane %v1202, 1
        %v1204 = vadd.f32 %v1202, %v1203
        %v1205 = vadd.f32 %v1125, %v1133
        %v1206 = vadd.f32 %v1205, %v1141
        %v1207 = vadd.f32 %v1206, %v1149
        %v1208 = vrot.slane %v1207, 4
        %v1209 = vadd.f32 %v1207, %v1208
        %v1210 = vrot.slane %v1209, 2
        %v1211 = vadd.f32 %v1209, %v1210
        %v1212 = vrot.slane %v1211, 1
        %v1213 = vadd.f32 %v1211, %v1212
        %v1214 = vadd.f32 %v1126, %v1134
        %v1215 = vadd.f32 %v1214, %v1142
        %v1216 = vadd.f32 %v1215, %v1150
        %v1217 = vrot.slane %v1216, 4
        %v1218 = vadd.f32 %v1216, %v1217
        %v1219 = vrot.slane %v1218, 2
        %v1220 = vadd.f32 %v1218, %v1219
        %v1221 = vrot.slane %v1220, 1
        %v1222 = vadd.f32 %v1220, %v1221
        %1223 = vst [vmem:[#allocation3] sm:$0x1] %v1159
        %1224 = vst [vmem:[#allocation3 + $0x1] sm:$0x1] %v1168
        %1225 = vst [vmem:[#allocation3 + $0x2] sm:$0x1] %v1177
        %1226 = vst [vmem:[#allocation3 + $0x3] sm:$0x1] %v1186
        %1227 = vst [vmem:[#allocation3 + $0x4] sm:$0x1] %v1195
        %1228 = vst [vmem:[#allocation3 + $0x5] sm:$0x1] %v1204
        %1229 = vst [vmem:[#allocation3 + $0x6] sm:$0x1] %v1213
        %1230 = vst [vmem:[#allocation3 + $0x7] sm:$0x1] %v1222
        %v1231 = vld [vmem:[#allocation3] sm:$0xff]
        %s1232 = sld [smem:[#allocation5]]
        %v1233 = vstv %s1232
        %v1234 = vadd.f32 %v1231, %v1233
        %v1235 = vld [vmem:[%s370] sm:$0xff]
        %v1236 = vadd.f32 %v1235, 1.0
        %v1237 = vmul.f32 %v1236, 0.5
        %v1238 = vsub.f32 0.0, %v1234
        %v1239 = vmax.f32 %v1238, 0.0
        %v1240 = vand.u32 2147483647, %v1234
        %v1241 = vsub.f32 0.0, %v1240
        %v1242 = vmul.f32 %v1241, 1.442695
        %v1243 = vpow.pop %v1242
        %v1244 = vadd.f32 %v1243, 1.0
        %v1245 = vlog2.pop %v1244
        %v1246 = vmul.f32 %v1245, 0.6931472
        %v1247 = vadd.f32 %v1239, %v1246
        %v1248 = vsub.f32 1.0, %v1237
        %v1249 = vmul.f32 %v1248, %v1234
        %v1250 = vadd.f32 %v1247, %v1249
        %s1251 = sadd.s32 %s27, %s28
        %s1252 = smul.u32 %s1251, 1024
        %s1253 = sadd.s32 %s1252, 1024
        %p1254 = scmp.le.s32.totalorder %s1253, 512
        // Predicated region
        $region57: #{tpu_custom_call.1} parent=51 // pred_check
          %p1255 = pneg %p1254
        $region58: #{tpu_custom_call.1} parent=51 // pred_check_branch
          %1257 = sbr.rel (%p1255) target = $region60
        $region59: #{tpu_custom_call.1} parent=51 // pred_region
          %v1258 = vld [vmem:[#allocation4] sm:$0xff]
          %v1259 = vadd.f32 %v1258, %v1250
          %1260 = vst [vmem:[#allocation4] sm:$0xff] %v1259
        $region60: #{tpu_custom_call.1} parent=51 // pred_fallthru
          _
        %p1261 = scmp.gt.s32.totalorder %s1253, 512
        // Predicated region
        $region61: #{tpu_custom_call.1} parent=51 // pred_check
          %p1262 = pneg %p1261
        $region62: #{tpu_custom_call.1} parent=51 // pred_check_branch
          %1264 = sbr.rel (%p1262) target = $region64
        $region63: #{tpu_custom_call.1} parent=51 // pred_region
          %v1265 = vlaneseq
          %v1266 = vshrl.u32 %v1265, 7
          %v1267 = vlaneseq
          %v1268 = vand.u32 %v1267, 127
          %v1269 = vmul.u32 %v1266, 128
          %v1270 = vstv %s1252
          %v1271 = vadd.s32 %v1270, %v1269
          %v1272 = vadd.s32 %v1271, %v1268
          %v1273 = vld [vmem:[#allocation4] sm:$0xff]
          %vm1274 = vcmp.lt.s32.totalorder %v1272, 512
          %v1275 = vsel %vm1274, %v1250, 0.0
          %v1276 = vadd.f32 %v1273, %v1275
          %1277 = vst [vmem:[#allocation4] sm:$0xff] %v1276
        $region64: #{tpu_custom_call.1} parent=51 // pred_fallthru
          _
        // Predicated region
        $region65: #{tpu_custom_call.1} parent=51 // pred_check
          %p1278 = pneg %p372
        $region66: #{tpu_custom_call.1} parent=51 // pred_check_branch
          %1280 = sbr.rel (%p1278) target = $region68
        $region67: #{tpu_custom_call.1} parent=51 // pred_region
          %v1281 = vld [vmem:[#allocation4] sm:$0xff]
          %1282 = vadd.xlane.f32.xlu0 %v1281
          %v1283 = vpop.xlane.xlu0 %1282
          %v1284 = vrot.slane %v1283, 4
          %v1285 = vadd.f32 %v1283, %v1284
          %v1286 = vrot.slane %v1285, 2
          %v1287 = vadd.f32 %v1285, %v1286
          %v1288 = vrot.slane %v1287, 1
          %v1289 = vadd.f32 %v1287, %v1288
          %v1290 = vadd.f32 %v1289, 0.0
          %1291 = vst [vmem:[%s351] sm:$0x1] %v1290
        $region68: #{tpu_custom_call.1} parent=51 // pred_fallthru
          _
        %s1292 = sand.u32 %s232, 1
        %s1293 = scalar_lea.sflag [#allocation7], %s1292
        %s1294 = sand.u32 %s232, 1
        %s1295 = scalar_lea.vmem [#allocation6], %s1294
        // Predicated region
        $region69: #{tpu_custom_call.1} parent=51 // pred_check
          %p1296 = pneg %p242
        $region70: #{tpu_custom_call.1} parent=51 // pred_check_branch
          %1298 = sbr.rel (%p1296) target = $region72
        $region71: #{tpu_custom_call.1} parent=51 // pred_region
          %1300 = vsyncadd %s1293, 0
          %s1301 = scalar_lea.hbm %s8, %s27
          %s1303 = sshll.u32 %s1295, 4
          %s1304 = int_to_ptr.vmem [resolvable:$true] %s1303
          %s1305 = sshll.u32 %s1301, 4
          %s1306 = int_to_ptr.hbm [resolvable:$true] %s1305
          %1308 = dma.vmem_to_hbm [thread:$0]  %s1304, 16, %s1306, %s1293
        $region72: #{tpu_custom_call.1} parent=51 // pred_fallthru
          _
      $region52: #{tpu_custom_call.1} parent=5 // pred_fallthru
        _
      %p1309 = scmp.le.s32.totalorder 2, %s18
      // Predicated region
      $region73: #{tpu_custom_call.1} parent=5 // pred_check
        %p1310 = pneg %p1309
      $region74: #{tpu_custom_call.1} parent=5 // pred_check_branch
        %1312 = sbr.rel (%p1310) target = $region76
      $region75: #{tpu_custom_call.1} parent=5 // pred_region
        %s1313 = ssub.s32 %s18, 2
        // Predicated region
        $region77: #{tpu_custom_call.1} parent=75 // pred_check
          %p1314 = pneg %p248
        $region78: #{tpu_custom_call.1} parent=75 // pred_check_branch
          %1316 = sbr.rel (%p1314) target = $region80
        $region79: #{tpu_custom_call.1} parent=75 // pred_region
          %s1317 = sand.u32 %s233, 1
          %s1318 = scalar_lea.sflag [#allocation7], %s1317
          %s1319 = sand.u32 %s233, 1
          %s1320 = scalar_lea.vmem [#allocation6], %s1319
          %1322 = dma.done %s1318, 16
        $region80: #{tpu_custom_call.1} parent=75 // pred_fallthru
          _
      $region76: #{tpu_custom_call.1} parent=5 // pred_fallthru
        _
    $region6: #{tpu_custom_call.1} parent=1 // loop_footer
      %s22 = sadd.s32 1, %s18
    $region7: #{tpu_custom_call.1} parent=1 // loop_footer_branch
      %17 = sbr.rel target = $region3
    $region8: #{tpu_custom_call.1} parent=1 // loop_exit
      _
    %1323 = vsyncpa [#allocation7], 1
    %s1324 = scalar_lea.sflag [#allocation7], 1
    %1325 = vsyncpa %s1324, 1

</llo_original>
